<compile_context>
chip_gen: v7x
topology: tpu7x:2x2x1
jax: 0.10.0
libtpu: 0.0.40
codegen_flags: <defaults>
</compile_context>

<pallas_src>
import functools

import numpy as np

import jax
import jax.numpy as jnp
from jax.experimental import pallas as pl
from jax.experimental.pallas import tpu as pltpu

# ----------------------------- hyper-params ---------------------------------
OBS_ENCODE_OUT = 64
DIM_FIRST_LAYER = 64
MLP_HUNITS = 128
DIM_STATE = 3
NUM_PAR_PF = 8
IN_CHANNELS = 3
IMG = 16
BATCH = 2

CONV1_CH = 16
CONV2_CH = 32
H1 = IMG // 2            # conv1 output spatial (8)
H2 = IMG // 4            # conv2 output spatial (4)
N_POS2 = H2 * H2         # conv2 output positions per image (16)
ENC_FLAT = CONV2_CH * N_POS2   # 512
OUT_PAD = 128            # lane-dense padded width of the MLP output slab
P1_K = 32                # conv1 im2col K (9*3=27 padded to 32)

# ---- weight-slab row offsets (all blocks 128-lane padded, rows mult. of 8) --
OFF_W1 = 0                         # (27->32, 16)   conv1 matmul weight
OFF_W2 = OFF_W1 + 32               # (144, 32)      conv2 flattened weight
OFF_WENC = OFF_W2 + 144            # (512, 64)      enc_fc (pos-major rows)
OFF_WF = OFF_WENC + ENC_FLAT       # (64, 64)       first_layer
OFF_WM1 = OFF_WF + DIM_FIRST_LAYER  # (128, 128)    mlp1 weight for [res | z]
OFF_WM2 = OFF_WM1 + MLP_HUNITS     # (128, 128)     mlp2
OFF_WM3 = OFF_WM2 + MLP_HUNITS     # (128, 128)     mlp3 (lane padded to 128)
W_SLAB_ROWS = OFF_WM3 + MLP_HUNITS  # 1136

# ---- bias-slab rows (8, 128) ------------------------------------------------
B_ROW_CONV1, B_ROW_CONV2, B_ROW_ENC, B_ROW_FIRST = 0, 1, 2, 3
B_ROW_MLP1, B_ROW_WM1C, B_ROW_MLP2, B_ROW_MLP3 = 4, 5, 6, 7

_VMEM = pl.BlockSpec(memory_space=pltpu.MemorySpace.VMEM)


# ------------------------------ fused kernel ---------------------------------
def _fused_proposer_kernel(p1_ref, z_ref, orient_ref, g2_ref, w_ref, b_ref,
                           o_ref, *, batch, num_par):
    f32 = jnp.float32
    rows2 = batch * N_POS2                                   # conv2 output rows (pos-major)

    # Bias slab is a single (8,128) vreg; weights are tile-aligned ref slices,
    # lane-narrowed on the value (cheap) so activations keep natural widths.
    b_all = b_ref[...]
    b1 = b_all[B_ROW_CONV1:B_ROW_CONV1 + 1, :CONV1_CH]
    b2 = b_all[B_ROW_CONV2:B_ROW_CONV2 + 1, :CONV2_CH]
    benc = b_all[B_ROW_ENC:B_ROW_ENC + 1, :OBS_ENCODE_OUT]
    bf = b_all[B_ROW_FIRST:B_ROW_FIRST + 1, :DIM_FIRST_LAYER]
    bm1 = b_all[B_ROW_MLP1:B_ROW_MLP1 + 1, :]
    wm1c = b_all[B_ROW_WM1C:B_ROW_WM1C + 1, :]
    bm2 = b_all[B_ROW_MLP2:B_ROW_MLP2 + 1, :]
    bm3 = b_all[B_ROW_MLP3:B_ROW_MLP3 + 1, :]

    # ---- conv1 (matmul on pre-im2col'd external input) + ReLU ---------------
    w1 = w_ref[OFF_W1:OFF_W1 + P1_K, :][:, :CONV1_CH]        # (32,16), rows 27..31 zero pad
    h1 = jnp.maximum(
        jnp.dot(p1_ref[...], w1, preferred_element_type=f32) + b1, 0.0)   # (B*64, 16)

    # ---- conv2: constant 0/1 gather matmul, then ONE K=144 matmul -----------
    pg = jnp.dot(g2_ref[...], h1, preferred_element_type=f32)             # (9*rows2, 16)
    pcols = jnp.concatenate(
        [pg[k * rows2:(k + 1) * rows2, :] for k in range(9)], axis=-1)    # (rows2, 144)
    w2 = w_ref[OFF_W2:OFF_W2 + 9 * CONV1_CH, :][:, :CONV2_CH]             # (144, 32)
    h2 = jnp.maximum(
        jnp.dot(pcols, w2, preferred_element_type=f32) + b2, 0.0)         # (rows2, 32)

    # ---- enc_fc: ONE (B,512)@(512,64) dot (weight pre-permuted pos-major) ---
    h2cols = jnp.concatenate(
        [h2[p * batch:(p + 1) * batch, :] for p in range(N_POS2)], axis=-1)  # (B, 512)
    wenc = w_ref[OFF_WENC:OFF_WENC + ENC_FLAT, :][:, :OBS_ENCODE_OUT]     # (512, 64)
    enc = jnp.maximum(
        jnp.dot(h2cols, wenc, preferred_element_type=f32) + benc, 0.0)    # (B, 64)

    # ---- per-row normalization (torch unbiased std; tiny guard vs var==0) ---
    mean = jnp.mean(enc, axis=-1, keepdims=True)
    xc = enc - mean
    var = jnp.sum(xc * xc, axis=-1, keepdims=True) * (1.0 / (OBS_ENCODE_OUT - 1))
    xn = xc * jax.lax.rsqrt(jnp.maximum(var, 1e-12))                      # rsqrt -> EUP

    # ---- first_layer Linear + ReLU ------------------------------------------
    wf = w_ref[OFF_WF:OFF_WF + DIM_FIRST_LAYER, :][:, :DIM_FIRST_LAYER]   # (64, 64)
    res = jnp.maximum(
        jnp.dot(xn, wf, preferred_element_type=f32) + bf, 0.0)            # (B, 64)

    # ---- MLP layer 1: replicate res over particles (torch .repeat order),
    #      lane-concat with z -> exact (P*B,128) tile, single dot; orientation
    #      term stays on the VPU as an outer product. ---------------------------
    res_rep = jnp.concatenate([res] * num_par, axis=0)                    # (P*B, 64)
    orient_rep = jnp.concatenate([orient_ref[...]] * num_par, axis=0)     # (P*B, 1)
    xz = jnp.concatenate([res_rep, z_ref[...]], axis=-1)                  # (P*B, 128)
    wm1 = w_ref[OFF_WM1:OFF_WM1 + MLP_HUNITS, :]                          # (128, 128)
    h = jnp.maximum(
        jnp.dot(xz, wm1, preferred_element_type=f32) + orient_rep * wm1c + bm1, 0.0)

    wm2 = w_ref[OFF_WM2:OFF_WM2 + MLP_HUNITS, :]
    h = jnp.maximum(jnp.dot(h, wm2, preferred_element_type=f32) + bm2, 0.0)

    # lane-dense (P*B, 128) output slab; first DIM_STATE columns are the proposal
    wm3 = w_ref[OFF_WM3:OFF_WM3 + MLP_HUNITS, :]
    o_ref[...] = jnp.dot(h, wm3, preferred_element_type=f32) + bm3


# ------------------------- wrapper-side glue (tiny XLA) -----------------------
def _im2col_conv1(x):
    """x: (N, C, H, W) NCHW -> (N*Ho*Wo, 32) patches, feature order (kh, kw, c).

    Runs on the external input only (small wrapper-side XLA work that fuses with
    the z draw under jit); last dim zero-padded 27 -> 32 for an aligned K.
    """
    n, c, h, w = x.shape
    xp = jnp.pad(x, ((0, 0), (0, 0), (1, 1), (1, 1)))
    ho, wo = h // 2, w // 2
    cols = []
    for di in range(3):
        for dj in range(3):
            sl = xp[:, :, di:di + 2 * ho:2, dj:dj + 2 * wo:2]       # (n, c, ho, wo)
            cols.append(sl.transpose(0, 2, 3, 1).reshape(n * ho * wo, c))
    cols = jnp.concatenate(cols, axis=-1)                           # (n*ho*wo, 27)
    return jnp.pad(cols, ((0, 0), (0, P1_K - 9 * c)))               # (n*ho*wo, 32)


def _build_conv2_gather(batch):
    """Constant 0/1 matrix turning conv2's im2col gather into a matmul.

    Row (k*rows2 + pos*batch + n) selects conv1-output row (n, hi, wi) for
    kernel tap k=(di,dj) at conv2 position pos=(ho,wo); zero rows encode the
    pad=1 border.  Shape: (9*batch*16, batch*64).  NOTE: O(batch^2) — tile or
    compress (bf16/int8) before scaling batch up.
    """
    rows1 = batch * H1 * H1
    rows2 = batch * N_POS2
    g = np.zeros((9, rows2, rows1), np.float32)
    for n in range(batch):
        for ho in range(H2):
            for wo in range(H2):
                r2 = (ho * H2 + wo) * batch + n
                for di in range(3):
                    for dj in range(3):
                        hi = 2 * ho + di - 1
                        wi = 2 * wo + dj - 1
                        if 0 <= hi < H1 and 0 <= wi < H1:
                            g[di * 3 + dj, r2, n * H1 * H1 + hi * H1 + wi] = 1.0
    return jnp.asarray(g.reshape(9 * rows2, rows1))


# ------------------------------ parameters -----------------------------------
def _init_params(key):
    """Torch-default-style init in PyTorch layouts."""
    def dense(k, fan_in, fan_out):
        bound = 1.0 / float(np.sqrt(fan_in))
        kw, kb = jax.random.split(k)
        w = jax.random.uniform(kw, (fan_in, fan_out), jnp.float32, -bound, bound)
        b = jax.random.uniform(kb, (1, fan_out), jnp.float32, -bound, bound)
        return w, b

    def conv(k, out_ch, in_ch, ksz):
        fan_in = in_ch * ksz * ksz
        bound = 1.0 / float(np.sqrt(fan_in))
        kw, kb = jax.random.split(k)
        w = jax.random.uniform(kw, (out_ch, in_ch, ksz, ksz), jnp.float32, -bound, bound)
        b = jax.random.uniform(kb, (1, out_ch), jnp.float32, -bound, bound)
        return w, b

    ks = jax.random.split(key, 7)
    p = {}
    p["conv1_w"], p["conv1_b"] = conv(ks[0], CONV1_CH, IN_CHANNELS, 3)     # 16x16 -> 8x8
    p["conv2_w"], p["conv2_b"] = conv(ks[1], CONV2_CH, CONV1_CH, 3)        # 8x8  -> 4x4
    p["enc_fc_w"], p["enc_fc_b"] = dense(ks[2], ENC_FLAT, OBS_ENCODE_OUT)  # rows in NCHW (c,pos) order
    p["first_w"], p["first_b"] = dense(ks[3], OBS_ENCODE_OUT, DIM_FIRST_LAYER)
    p["mlp1_w"], p["mlp1_b"] = dense(ks[4], DIM_FIRST_LAYER * 2 + 1, MLP_HUNITS)
    p["mlp2_w"], p["mlp2_b"] = dense(ks[5], MLP_HUNITS, MLP_HUNITS)
    p["mlp3_w"], p["mlp3_b"] = dense(ks[6], MLP_HUNITS, DIM_STATE)
    return p


def _prepare_kernel_params(p, batch):
    """One-time conversion of PyTorch-layout params into two kernel-ready slabs."""
    def pad_block(w, rows_pad, lanes_pad=128):
        r, c = w.shape
        return jnp.pad(w, ((0, rows_pad - r), (0, lanes_pad - c)))

    def pad_row(b):
        b = b.reshape(1, -1)
        return jnp.pad(b, ((0, 0), (0, 128 - b.shape[1])))

    # conv weights -> matmul layouts with (kh, kw, c_in) feature order
    w1m = p["conv1_w"].transpose(2, 3, 1, 0).reshape(9 * IN_CHANNELS, CONV1_CH)    # (27, 16)
    w2flat = p["conv2_w"].transpose(2, 3, 1, 0).reshape(9 * CONV1_CH, CONV2_CH)    # (144, 32)
    # enc_fc: PyTorch rows are NCHW (c, pos) order -> regroup pos-major (pos, c)
    wencflat = (p["enc_fc_w"].reshape(CONV2_CH, N_POS2, OBS_ENCODE_OUT)
                .transpose(1, 0, 2).reshape(ENC_FLAT, OBS_ENCODE_OUT))             # (512, 64)
    # split mlp1 weight over the [result | z] block vs the orientation row
    w1mlp = p["mlp1_w"]                                                            # (129, 128)
    wm1ab = w1mlp[:2 * DIM_FIRST_LAYER]                                            # (128, 128)
    wm1c = w1mlp[2 * DIM_FIRST_LAYER:]                                             # (1, 128)
    wm3pad = jnp.pad(p["mlp3_w"], ((0, 0), (0, OUT_PAD - DIM_STATE)))              # (128, 128)

    w_slab = jnp.concatenate([
        pad_block(w1m, P1_K),           # OFF_W1
        pad_block(w2flat, 9 * CONV1_CH),  # OFF_W2
        pad_block(wencflat, ENC_FLAT),  # OFF_WENC
        pad_block(p["first_w"], DIM_FIRST_LAYER),  # OFF_WF
        pad_block(wm1ab, MLP_HUNITS),   # OFF_WM1
        pad_block(p["mlp2_w"], MLP_HUNITS),  # OFF_WM2
        pad_block(wm3pad, MLP_HUNITS),  # OFF_WM3
    ], axis=0)                          # (1136, 128) f32, ~568 KiB
    assert w_slab.shape == (W_SLAB_ROWS, 128)

    b_slab = jnp.concatenate([
        pad_row(p["conv1_b"]), pad_row(p["conv2_b"]), pad_row(p["enc_fc_b"]),
        pad_row(p["first_b"]), pad_row(p["mlp1_b"]), pad_row(wm1c),
        pad_row(p["mlp2_b"]),
        pad_row(jnp.pad(p["mlp3_b"], ((0, 0), (0, OUT_PAD - DIM_STATE)))),
    ], axis=0)                          # (8, 128) — exactly one vreg
    assert b_slab.shape == (8, 128)

    return {"w_slab": w_slab, "b_slab": b_slab, "g2": _build_conv2_gather(batch)}


# ------------------------------ forward pass ----------------------------------
def proposer_forward(kp, obs, orientation, z, num_par=NUM_PAR_PF):
    batch = obs.shape[0]
    # the conv2 gather matrix bakes the batch size in -- guard against mismatch
    prep_batch = kp["g2"].shape[1] // (H1 * H1)
    assert batch == prep_batch, (batch, prep_batch)
    rows_out = num_par * batch
    assert z.shape == (rows_out, DIM_FIRST_LAYER), z.shape
    assert orientation.shape == (batch, 1), orientation.shape

    p1 = _im2col_conv1(obs)                                   # (B*64, 32)
    args = (p1, z, orientation, kp["g2"], kp["w_slab"], kp["b_slab"])

    rows1 = batch * H1 * H1
    rows2 = batch * N_POS2
    flops = 2 * (rows1 * P1_K * CONV1_CH
                 + 9 * rows2 * rows1 * CONV1_CH
                 + rows2 * 9 * CONV1_CH * CONV2_CH
                 + batch * ENC_FLAT * OBS_ENCODE_OUT
                 + batch * OBS_ENCODE_OUT * DIM_FIRST_LAYER
                 + rows_out * 2 * DIM_FIRST_LAYER * MLP_HUNITS
                 + rows_out * MLP_HUNITS * MLP_HUNITS
                 + rows_out * MLP_HUNITS * OUT_PAD)
    bytes_accessed = int(sum(int(np.prod(a.shape)) * a.dtype.itemsize for a in args)
                         + rows_out * OUT_PAD * 4)

    out = pl.pallas_call(
        functools.partial(_fused_proposer_kernel, batch=batch, num_par=num_par),
        out_shape=jax.ShapeDtypeStruct((rows_out, OUT_PAD), jnp.float32),
        in_specs=[_VMEM] * len(args),
        out_specs=_VMEM,
        cost_estimate=pl.CostEstimate(
            flops=flops, transcendentals=batch, bytes_accessed=bytes_accessed),
    )(*args)
    return out[:, :DIM_STATE]                                 # (P*B, dim_state)


# ------------------------------ main ------------------------------------------
if __name__ == "__main__":
    key = jax.random.PRNGKey(0)
    k_obs, k_orient, k_params, k_noise = jax.random.split(key, 4)

    obs = jax.random.normal(k_obs, (BATCH, IN_CHANNELS, IMG, IMG), jnp.float32)
    orientation = jax.random.normal(k_orient, (BATCH, 1), jnp.float32)
    params = _init_params(k_params)
    kparams = _prepare_kernel_params(params, BATCH)
    # torch.randn_like(result) equivalent, drawn outside the kernel
    z = jax.random.normal(k_noise, (NUM_PAR_PF * BATCH, DIM_FIRST_LAYER), jnp.float32)

    fwd = jax.jit(proposer_forward)
    proposal = jax.block_until_ready(fwd(kparams, obs, orientation, z))

    assert proposal.shape == (NUM_PAR_PF * BATCH, DIM_STATE), proposal.shape
    assert proposal.dtype == jnp.float32
    assert bool(jnp.all(jnp.isfinite(proposal)))
    print("KERNEL_OK")
</pallas_src>

<mosaic_0001>
module attributes {stable_mosaic.version = 11 : i64} {
  func.func @_fused_proposer_kernel(%arg0: memref<128x32xf32, #tpu.memory_space<vmem>>, %arg1: memref<16x64xf32, #tpu.memory_space<vmem>>, %arg2: memref<2x1xf32, #tpu.memory_space<vmem>>, %arg3: memref<288x128xf32, #tpu.memory_space<vmem>>, %arg4: memref<1136x128xf32, #tpu.memory_space<vmem>>, %arg5: memref<8x128xf32, #tpu.memory_space<vmem>>, %arg6: memref<16x128xf32, #tpu.memory_space<vmem>>) attributes {dimension_semantics = [], scalar_prefetch = 0 : i64, scratch_operands = 0 : i64, tpu.core_type = #tpu.core_type<tc>} {
    %c0 = arith.constant 0 : index
    %c0_0 = arith.constant 0 : index
    %0 = vector.load %arg5[%c0, %c0_0] : memref<8x128xf32, #tpu.memory_space<vmem>>, vector<8x128xf32>
    %1 = vector.extract_strided_slice %0 {offsets = [0, 0], sizes = [1, 16], strides = [1, 1]} : vector<8x128xf32> to vector<1x16xf32>
    %2 = vector.extract_strided_slice %0 {offsets = [1, 0], sizes = [1, 32], strides = [1, 1]} : vector<8x128xf32> to vector<1x32xf32>
    %3 = vector.extract_strided_slice %0 {offsets = [2, 0], sizes = [1, 64], strides = [1, 1]} : vector<8x128xf32> to vector<1x64xf32>
    %4 = vector.extract_strided_slice %0 {offsets = [3, 0], sizes = [1, 64], strides = [1, 1]} : vector<8x128xf32> to vector<1x64xf32>
    %5 = vector.extract_strided_slice %0 {offsets = [4, 0], sizes = [1, 128], strides = [1, 1]} : vector<8x128xf32> to vector<1x128xf32>
    %6 = vector.extract_strided_slice %0 {offsets = [5, 0], sizes = [1, 128], strides = [1, 1]} : vector<8x128xf32> to vector<1x128xf32>
    %7 = vector.extract_strided_slice %0 {offsets = [6, 0], sizes = [1, 128], strides = [1, 1]} : vector<8x128xf32> to vector<1x128xf32>
    %8 = vector.extract_strided_slice %0 {offsets = [7, 0], sizes = [1, 128], strides = [1, 1]} : vector<8x128xf32> to vector<1x128xf32>
    %c0_1 = arith.constant 0 : index
    %c0_2 = arith.constant 0 : index
    %9 = vector.load %arg4[%c0_1, %c0_2] : memref<1136x128xf32, #tpu.memory_space<vmem>>, vector<32x128xf32>
    %10 = vector.extract_strided_slice %9 {offsets = [0, 0], sizes = [32, 16], strides = [1, 1]} : vector<32x128xf32> to vector<32x16xf32>
    %c0_3 = arith.constant 0 : index
    %c0_4 = arith.constant 0 : index
    %11 = vector.load %arg0[%c0_3, %c0_4] : memref<128x32xf32, #tpu.memory_space<vmem>>, vector<128x32xf32>
    %cst = arith.constant dense<0.000000e+00> : vector<128x16xf32>
    %12 = tpu.matmul %11, %10, %cst {dimension_numbers = #tpu.dot_dimension_numbers<[1], [0], [0], [1], [0, 0, 1, 1], [], []>} : vector<128x32xf32>, vector<32x16xf32>, vector<128x16xf32> -> vector<128x16xf32>
    %13 = vector.broadcast %1 : vector<1x16xf32> to vector<128x16xf32>
    %14 = arith.addf %12, %13 : vector<128x16xf32>
    %cst_5 = arith.constant 0.000000e+00 : f32
    %15 = vector.broadcast %cst_5 : f32 to vector<128x16xf32>
    %16 = arith.maximumf %14, %15 : vector<128x16xf32>
    %c0_6 = arith.constant 0 : index
    %c0_7 = arith.constant 0 : index
    %17 = vector.load %arg3[%c0_6, %c0_7] : memref<288x128xf32, #tpu.memory_space<vmem>>, vector<288x128xf32>
    %cst_8 = arith.constant dense<0.000000e+00> : vector<288x16xf32>
    %18 = tpu.matmul %17, %16, %cst_8 {dimension_numbers = #tpu.dot_dimension_numbers<[1], [0], [0], [1], [0, 0, 1, 1], [], []>} : vector<288x128xf32>, vector<128x16xf32>, vector<288x16xf32> -> vector<288x16xf32>
    %19 = vector.extract_strided_slice %18 {offsets = [0, 0], sizes = [32, 16], strides = [1, 1]} : vector<288x16xf32> to vector<32x16xf32>
    %20 = vector.extract_strided_slice %18 {offsets = [32, 0], sizes = [32, 16], strides = [1, 1]} : vector<288x16xf32> to vector<32x16xf32>
    %21 = vector.extract_strided_slice %18 {offsets = [64, 0], sizes = [32, 16], strides = [1, 1]} : vector<288x16xf32> to vector<32x16xf32>
    %22 = vector.extract_strided_slice %18 {offsets = [96, 0], sizes = [32, 16], strides = [1, 1]} : vector<288x16xf32> to vector<32x16xf32>
    %23 = vector.extract_strided_slice %18 {offsets = [128, 0], sizes = [32, 16], strides = [1, 1]} : vector<288x16xf32> to vector<32x16xf32>
    %24 = vector.extract_strided_slice %18 {offsets = [160, 0], sizes = [32, 16], strides = [1, 1]} : vector<288x16xf32> to vector<32x16xf32>
    %25 = vector.extract_strided_slice %18 {offsets = [192, 0], sizes = [32, 16], strides = [1, 1]} : vector<288x16xf32> to vector<32x16xf32>
    %26 = vector.extract_strided_slice %18 {offsets = [224, 0], sizes = [32, 16], strides = [1, 1]} : vector<288x16xf32> to vector<32x16xf32>
    %27 = vector.extract_strided_slice %18 {offsets = [256, 0], sizes = [32, 16], strides = [1, 1]} : vector<288x16xf32> to vector<32x16xf32>
    %28 = tpu.concatenate %19, %20, %21, %22, %23, %24, %25, %26, %27 in 1 : vector<32x16xf32>, vector<32x16xf32>, vector<32x16xf32>, vector<32x16xf32>, vector<32x16xf32>, vector<32x16xf32>, vector<32x16xf32>, vector<32x16xf32>, vector<32x16xf32> -> vector<32x144xf32>
    %c32 = arith.constant 32 : index
    %c0_9 = arith.constant 0 : index
    %29 = vector.load %arg4[%c32, %c0_9] : memref<1136x128xf32, #tpu.memory_space<vmem>>, vector<144x128xf32>
    %30 = vector.extract_strided_slice %29 {offsets = [0, 0], sizes = [144, 32], strides = [1, 1]} : vector<144x128xf32> to vector<144x32xf32>
    %cst_10 = arith.constant dense<0.000000e+00> : vector<32x32xf32>
    %31 = tpu.matmul %28, %30, %cst_10 {dimension_numbers = #tpu.dot_dimension_numbers<[1], [0], [0], [1], [0, 0, 1, 1], [], []>} : vector<32x144xf32>, vector<144x32xf32>, vector<32x32xf32> -> vector<32x32xf32>
    %32 = vector.broadcast %2 : vector<1x32xf32> to vector<32x32xf32>
    %33 = arith.addf %31, %32 : vector<32x32xf32>
    %cst_11 = arith.constant 0.000000e+00 : f32
    %34 = vector.broadcast %cst_11 : f32 to vector<32x32xf32>
    %35 = arith.maximumf %33, %34 : vector<32x32xf32>
    %36 = vector.extract_strided_slice %35 {offsets = [0, 0], sizes = [2, 32], strides = [1, 1]} : vector<32x32xf32> to vector<2x32xf32>
    %37 = vector.extract_strided_slice %35 {offsets = [2, 0], sizes = [2, 32], strides = [1, 1]} : vector<32x32xf32> to vector<2x32xf32>
    %38 = vector.extract_strided_slice %35 {offsets = [4, 0], sizes = [2, 32], strides = [1, 1]} : vector<32x32xf32> to vector<2x32xf32>
    %39 = vector.extract_strided_slice %35 {offsets = [6, 0], sizes = [2, 32], strides = [1, 1]} : vector<32x32xf32> to vector<2x32xf32>
    %40 = vector.extract_strided_slice %35 {offsets = [8, 0], sizes = [2, 32], strides = [1, 1]} : vector<32x32xf32> to vector<2x32xf32>
    %41 = vector.extract_strided_slice %35 {offsets = [10, 0], sizes = [2, 32], strides = [1, 1]} : vector<32x32xf32> to vector<2x32xf32>
    %42 = vector.extract_strided_slice %35 {offsets = [12, 0], sizes = [2, 32], strides = [1, 1]} : vector<32x32xf32> to vector<2x32xf32>
    %43 = vector.extract_strided_slice %35 {offsets = [14, 0], sizes = [2, 32], strides = [1, 1]} : vector<32x32xf32> to vector<2x32xf32>
    %44 = vector.extract_strided_slice %35 {offsets = [16, 0], sizes = [2, 32], strides = [1, 1]} : vector<32x32xf32> to vector<2x32xf32>
    %45 = vector.extract_strided_slice %35 {offsets = [18, 0], sizes = [2, 32], strides = [1, 1]} : vector<32x32xf32> to vector<2x32xf32>
    %46 = vector.extract_strided_slice %35 {offsets = [20, 0], sizes = [2, 32], strides = [1, 1]} : vector<32x32xf32> to vector<2x32xf32>
    %47 = vector.extract_strided_slice %35 {offsets = [22, 0], sizes = [2, 32], strides = [1, 1]} : vector<32x32xf32> to vector<2x32xf32>
    %48 = vector.extract_strided_slice %35 {offsets = [24, 0], sizes = [2, 32], strides = [1, 1]} : vector<32x32xf32> to vector<2x32xf32>
    %49 = vector.extract_strided_slice %35 {offsets = [26, 0], sizes = [2, 32], strides = [1, 1]} : vector<32x32xf32> to vector<2x32xf32>
    %50 = vector.extract_strided_slice %35 {offsets = [28, 0], sizes = [2, 32], strides = [1, 1]} : vector<32x32xf32> to vector<2x32xf32>
    %51 = vector.extract_strided_slice %35 {offsets = [30, 0], sizes = [2, 32], strides = [1, 1]} : vector<32x32xf32> to vector<2x32xf32>
    %52 = tpu.concatenate %36, %37, %38, %39, %40, %41, %42, %43, %44, %45, %46, %47, %48, %49, %50, %51 in 1 : vector<2x32xf32>, vector<2x32xf32>, vector<2x32xf32>, vector<2x32xf32>, vector<2x32xf32>, vector<2x32xf32>, vector<2x32xf32>, vector<2x32xf32>, vector<2x32xf32>, vector<2x32xf32>, vector<2x32xf32>, vector<2x32xf32>, vector<2x32xf32>, vector<2x32xf32>, vector<2x32xf32>, vector<2x32xf32> -> vector<2x512xf32>
    %c176 = arith.constant 176 : index
    %c0_12 = arith.constant 0 : index
    %53 = vector.load %arg4[%c176, %c0_12] : memref<1136x128xf32, #tpu.memory_space<vmem>>, vector<512x128xf32>
    %54 = vector.extract_strided_slice %53 {offsets = [0, 0], sizes = [512, 64], strides = [1, 1]} : vector<512x128xf32> to vector<512x64xf32>
    %cst_13 = arith.constant dense<0.000000e+00> : vector<2x64xf32>
    %55 = tpu.matmul %52, %54, %cst_13 {dimension_numbers = #tpu.dot_dimension_numbers<[1], [0], [0], [1], [0, 0, 1, 1], [], []>} : vector<2x512xf32>, vector<512x64xf32>, vector<2x64xf32> -> vector<2x64xf32>
    %56 = vector.broadcast %3 : vector<1x64xf32> to vector<2x64xf32>
    %57 = arith.addf %55, %56 : vector<2x64xf32>
    %cst_14 = arith.constant 0.000000e+00 : f32
    %58 = vector.broadcast %cst_14 : f32 to vector<2x64xf32>
    %59 = arith.maximumf %57, %58 : vector<2x64xf32>
    %cst_15 = arith.constant dense<0.000000e+00> : vector<2xf32>
    %60 = vector.multi_reduction <add>, %59, %cst_15 [1] : vector<2x64xf32> to vector<2xf32>
    %61 = vector.shape_cast %60 : vector<2xf32> to vector<2x1xf32>
    %cst_16 = arith.constant 6.400000e+01 : f32
    %62 = vector.broadcast %cst_16 : f32 to vector<2x1xf32>
    %63 = arith.divf %61, %62 : vector<2x1xf32>
    %64 = vector.broadcast %63 : vector<2x1xf32> to vector<2x64xf32>
    %65 = arith.subf %59, %64 : vector<2x64xf32>
    %66 = arith.mulf %65, %65 : vector<2x64xf32>
    %cst_17 = arith.constant dense<0.000000e+00> : vector<2xf32>
    %67 = vector.multi_reduction <add>, %66, %cst_17 [1] : vector<2x64xf32> to vector<2xf32>
    %68 = vector.shape_cast %67 : vector<2xf32> to vector<2x1xf32>
    %cst_18 = arith.constant 0.0158730168 : f32
    %69 = vector.broadcast %cst_18 : f32 to vector<2x1xf32>
    %70 = arith.mulf %68, %69 : vector<2x1xf32>
    %cst_19 = arith.constant 9.99999996E-13 : f32
    %71 = vector.broadcast %cst_19 : f32 to vector<2x1xf32>
    %72 = arith.maximumf %70, %71 : vector<2x1xf32>
    %73 = math.rsqrt %72 : vector<2x1xf32>
    %74 = vector.broadcast %73 : vector<2x1xf32> to vector<2x64xf32>
    %75 = arith.mulf %65, %74 : vector<2x64xf32>
    %c688 = arith.constant 688 : index
    %c0_20 = arith.constant 0 : index
    %76 = vector.load %arg4[%c688, %c0_20] : memref<1136x128xf32, #tpu.memory_space<vmem>>, vector<64x128xf32>
    %77 = vector.extract_strided_slice %76 {offsets = [0, 0], sizes = [64, 64], strides = [1, 1]} : vector<64x128xf32> to vector<64x64xf32>
    %cst_21 = arith.constant dense<0.000000e+00> : vector<2x64xf32>
    %78 = tpu.matmul %75, %77, %cst_21 {dimension_numbers = #tpu.dot_dimension_numbers<[1], [0], [0], [1], [0, 0, 1, 1], [], []>} : vector<2x64xf32>, vector<64x64xf32>, vector<2x64xf32> -> vector<2x64xf32>
    %79 = vector.broadcast %4 : vector<1x64xf32> to vector<2x64xf32>
    %80 = arith.addf %78, %79 : vector<2x64xf32>
    %cst_22 = arith.constant 0.000000e+00 : f32
    %81 = vector.broadcast %cst_22 : f32 to vector<2x64xf32>
    %82 = arith.maximumf %80, %81 : vector<2x64xf32>
    %83 = tpu.concatenate %82, %82, %82, %82, %82, %82, %82, %82 in 0 : vector<2x64xf32>, vector<2x64xf32>, vector<2x64xf32>, vector<2x64xf32>, vector<2x64xf32>, vector<2x64xf32>, vector<2x64xf32>, vector<2x64xf32> -> vector<16x64xf32>
    %c0_23 = arith.constant 0 : index
    %c0_24 = arith.constant 0 : index
    %84 = vector.load %arg2[%c0_23, %c0_24] : memref<2x1xf32, #tpu.memory_space<vmem>>, vector<2x1xf32>
    %85 = tpu.concatenate %84, %84, %84, %84, %84, %84, %84, %84 in 0 : vector<2x1xf32>, vector<2x1xf32>, vector<2x1xf32>, vector<2x1xf32>, vector<2x1xf32>, vector<2x1xf32>, vector<2x1xf32>, vector<2x1xf32> -> vector<16x1xf32>
    %c0_25 = arith.constant 0 : index
    %c0_26 = arith.constant 0 : index
    %86 = vector.load %arg1[%c0_25, %c0_26] : memref<16x64xf32, #tpu.memory_space<vmem>>, vector<16x64xf32>
    %87 = tpu.concatenate %83, %86 in 1 : vector<16x64xf32>, vector<16x64xf32> -> vector<16x128xf32>
    %c752 = arith.constant 752 : index
    %c0_27 = arith.constant 0 : index
    %88 = vector.load %arg4[%c752, %c0_27] : memref<1136x128xf32, #tpu.memory_space<vmem>>, vector<128x128xf32>
    %cst_28 = arith.constant dense<0.000000e+00> : vector<16x128xf32>
    %89 = tpu.matmul %87, %88, %cst_28 {dimension_numbers = #tpu.dot_dimension_numbers<[1], [0], [0], [1], [0, 0, 1, 1], [], []>} : vector<16x128xf32>, vector<128x128xf32>, vector<16x128xf32> -> vector<16x128xf32>
    %90 = vector.broadcast %85 : vector<16x1xf32> to vector<16x128xf32>
    %91 = vector.broadcast %6 : vector<1x128xf32> to vector<16x128xf32>
    %92 = arith.mulf %90, %91 : vector<16x128xf32>
    %93 = arith.addf %89, %92 : vector<16x128xf32>
    %94 = vector.broadcast %5 : vector<1x128xf32> to vector<16x128xf32>
    %95 = arith.addf %93, %94 : vector<16x128xf32>
    %cst_29 = arith.constant 0.000000e+00 : f32
    %96 = vector.broadcast %cst_29 : f32 to vector<16x128xf32>
    %97 = arith.maximumf %95, %96 : vector<16x128xf32>
    %c880 = arith.constant 880 : index
    %c0_30 = arith.constant 0 : index
    %98 = vector.load %arg4[%c880, %c0_30] : memref<1136x128xf32, #tpu.memory_space<vmem>>, vector<128x128xf32>
    %cst_31 = arith.constant dense<0.000000e+00> : vector<16x128xf32>
    %99 = tpu.matmul %97, %98, %cst_31 {dimension_numbers = #tpu.dot_dimension_numbers<[1], [0], [0], [1], [0, 0, 1, 1], [], []>} : vector<16x128xf32>, vector<128x128xf32>, vector<16x128xf32> -> vector<16x128xf32>
    %100 = vector.broadcast %7 : vector<1x128xf32> to vector<16x128xf32>
    %101 = arith.addf %99, %100 : vector<16x128xf32>
    %cst_32 = arith.constant 0.000000e+00 : f32
    %102 = vector.broadcast %cst_32 : f32 to vector<16x128xf32>
    %103 = arith.maximumf %101, %102 : vector<16x128xf32>
    %c1008 = arith.constant 1008 : index
    %c0_33 = arith.constant 0 : index
    %104 = vector.load %arg4[%c1008, %c0_33] : memref<1136x128xf32, #tpu.memory_space<vmem>>, vector<128x128xf32>
    %cst_34 = arith.constant dense<0.000000e+00> : vector<16x128xf32>
    %105 = tpu.matmul %103, %104, %cst_34 {dimension_numbers = #tpu.dot_dimension_numbers<[1], [0], [0], [1], [0, 0, 1, 1], [], []>} : vector<16x128xf32>, vector<128x128xf32>, vector<16x128xf32> -> vector<16x128xf32>
    %106 = vector.broadcast %8 : vector<1x128xf32> to vector<16x128xf32>
    %107 = arith.addf %105, %106 : vector<16x128xf32>
    %c0_35 = arith.constant 0 : index
    %c0_36 = arith.constant 0 : index
    %108 = vector.load %arg6[%c0_35, %c0_36] : memref<16x128xf32, #tpu.memory_space<vmem>>, vector<16x128xf32>
    tpu.vector_store %arg6[%c0_35, %c0_36], %107 {strides = array<i32>} : memref<16x128xf32, #tpu.memory_space<vmem>>, vector<16x128xf32>,
    return
  }
}

</mosaic_0001>

<llo_original>
// kernel: proposer_forward.1
$region0: #{proposer_forward.1}
  #allocation0 [shape = 'u32[]', space=smem, size = 0x4, offset = 0x4, fixed_abs, tag = 'smem constant byte address 0x4 - core index']
  #allocation1 [shape = 'u32[144,128]{1,0:T(1,128)}', space=vmem, size = 0x12000, scoped, tag = 'internal scratch']
  %s0 = inlined_call_operand.vmem [shape: f32[128,32], index: 0, kind: input, shape index: {}]
  %s1 = inlined_call_operand.vmem [shape: f32[16,64], index: 1, kind: input, shape index: {}]
  %s2 = inlined_call_operand.vmem [shape: f32[2,1], index: 2, kind: input, shape index: {}]
  %s3 = inlined_call_operand.vmem [shape: f32[288,128], index: 3, kind: input, shape index: {}]
  %s4 = inlined_call_operand.vmem [shape: f32[1136,128], index: 4, kind: input, shape index: {}]
  %s5 = inlined_call_operand.vmem [shape: f32[8,128], index: 5, kind: input, shape index: {}]
  %s6 = inlined_call_operand.vmem [shape: f32[16,128], index: 6, kind: output, shape index: {}]
  %s7 = sld [smem:[#allocation0]]
  $region34: #{proposer_forward.1} parent=0
    _
  %s9 = ssub.s32 1, %s7
  %s10 = scalar_select 0, %s9, %s7
  // Predicated region
  $region2: #{proposer_forward.1} parent=0 // pred_check
    _
  $region3: #{proposer_forward.1} parent=0 // pred_check_branch
    %12 = sbr.rel (0) target = $region5
  $region4: #{proposer_forward.1} parent=0 // pred_region
    _
  $region5: #{proposer_forward.1} parent=0 // pred_fallthru
    _
  // Predicated region
  $region6: #{proposer_forward.1} parent=0 // pred_check
    _
  $region7: #{proposer_forward.1} parent=0 // pred_check_branch
    %14 = sbr.rel (0) target = $region9
  $region8: #{proposer_forward.1} parent=0 // pred_region
    _
  $region9: #{proposer_forward.1} parent=0 // pred_fallthru
    _
  // Predicated region
  $region10: #{proposer_forward.1} parent=0 // pred_check
    _
  $region11: #{proposer_forward.1} parent=0 // pred_check_branch
    %16 = sbr.rel (0) target = $region13
  $region12: #{proposer_forward.1} parent=0 // pred_region
    _
  $region13: #{proposer_forward.1} parent=0 // pred_fallthru
    _
  // Predicated region
  $region14: #{proposer_forward.1} parent=0 // pred_check
    _
  $region15: #{proposer_forward.1} parent=0 // pred_check_branch
    %18 = sbr.rel (0) target = $region17
  $region16: #{proposer_forward.1} parent=0 // pred_region
    _
  $region17: #{proposer_forward.1} parent=0 // pred_fallthru
    _
  // Predicated region
  $region18: #{proposer_forward.1} parent=0 // pred_check
    _
  $region19: #{proposer_forward.1} parent=0 // pred_check_branch
    %20 = sbr.rel (0) target = $region21
  $region20: #{proposer_forward.1} parent=0 // pred_region
    _
  $region21: #{proposer_forward.1} parent=0 // pred_fallthru
    _
  // Predicated region
  $region22: #{proposer_forward.1} parent=0 // pred_check
    _
  $region23: #{proposer_forward.1} parent=0 // pred_check_branch
    %22 = sbr.rel (0) target = $region25
  $region24: #{proposer_forward.1} parent=0 // pred_region
    _
  $region25: #{proposer_forward.1} parent=0 // pred_fallthru
    _
  %v23 = vld [vmem:[%s5] sm:$0xff]
  %v24 = vld [vmem:[%s4] sm:$0xff]
  %v25 = vld [vmem:[%s4 + $0x8] sm:$0xff]
  %v26 = vld [vmem:[%s4 + $0x10] sm:$0xff]
  %v27 = vld [vmem:[%s4 + $0x18] sm:$0xff]
  %v28 = vld [vmem:[%s0] sm:$0xff]
  %v29 = vld [vmem:[%s0 + $0x8] sm:$0xff]
  %v30 = vld [vmem:[%s0 + $0x10] sm:$0xff]
  %v31 = vld [vmem:[%s0 + $0x18] sm:$0xff]
  %v32 = vld [vmem:[%s0 + $0x20] sm:$0xff]
  %v33 = vld [vmem:[%s0 + $0x28] sm:$0xff]
  %v34 = vld [vmem:[%s0 + $0x30] sm:$0xff]
  %v35 = vld [vmem:[%s0 + $0x38] sm:$0xff]
  %v36 = vld [vmem:[%s0 + $0x40] sm:$0xff]
  %v37 = vld [vmem:[%s0 + $0x48] sm:$0xff]
  %v38 = vld [vmem:[%s0 + $0x50] sm:$0xff]
  %v39 = vld [vmem:[%s0 + $0x58] sm:$0xff]
  %v40 = vld [vmem:[%s0 + $0x60] sm:$0xff]
  %v41 = vld [vmem:[%s0 + $0x68] sm:$0xff]
  %v42 = vld [vmem:[%s0 + $0x70] sm:$0xff]
  %v43 = vld [vmem:[%s0 + $0x78] sm:$0xff]
  %v44 = vlaneseq
  %v45 = vshrl.u32 %v44, 7
  %v46 = vsub.s32 0, %v45
  %v47 = vrot.slane %v23, %v46
  %vm48 = vcmask 261120
  %v50 = vsel %vm48, %v28, 0
  %v53 = vsel %vm48, %v29, 0
  %v56 = vsel %vm48, %v30, 0
  %v59 = vsel %vm48, %v31, 0
  %v62 = vsel %vm48, %v32, 0
  %v65 = vsel %vm48, %v33, 0
  %v68 = vsel %vm48, %v34, 0
  %v71 = vsel %vm48, %v35, 0
  %v74 = vsel %vm48, %v36, 0
  %v77 = vsel %vm48, %v37, 0
  %v80 = vsel %vm48, %v38, 0
  %v83 = vsel %vm48, %v39, 0
  %v86 = vsel %vm48, %v40, 0
  %v89 = vsel %vm48, %v41, 0
  %v92 = vsel %vm48, %v42, 0
  %v95 = vsel %vm48, %v43, 0
  %97 = vmatprep.subr.mxu0 0.0
  %98 = vmatpush1.msra.mxu0 %v24
  %99 = vmatprep.subr.mxu0 0.0
  %100 = vmatpush1.msra.mxu0 %v25
  %101 = vmatprep.subr.mxu0 0.0
  %102 = vmatpush1.msra.mxu0 %v26
  %103 = vmatprep.subr.mxu0 0.0
  %104 = vmatpush1.msra.mxu0 %v27
  %105 = vmatprep.subr.mxu0 0.0
  %106 = vmatpush1.msra.mxu0 0.0
  %107 = vmatprep.subr.mxu0 0.0
  %108 = vmatpush1.msra.mxu0 0.0
  %109 = vmatprep.subr.mxu0 0.0
  %110 = vmatpush1.msra.mxu0 0.0
  %111 = vmatprep.subr.mxu0 0.0
  %112 = vmatpush1.msra.mxu0 0.0
  %113 = vmatprep.subr.mxu0 0.0
  %114 = vmatpush1.msra.mxu0 0.0
  %115 = vmatprep.subr.mxu0 0.0
  %116 = vmatpush1.msra.mxu0 0.0
  %117 = vmatprep.subr.mxu0 0.0
  %118 = vmatpush1.msra.mxu0 0.0
  %119 = vmatprep.subr.mxu0 0.0
  %120 = vmatpush1.msra.mxu0 0.0
  %121 = vmatprep.subr.mxu0 0.0
  %122 = vmatpush1.msra.mxu0 0.0
  %123 = vmatprep.subr.mxu0 0.0
  %124 = vmatpush1.msra.mxu0 0.0
  %125 = vmatprep.subr.mxu0 0.0
  %126 = vmatpush1.msra.mxu0 0.0
  %127 = vmatprep.subr.mxu0 0.0
  %128 = vmatpush1.msra.mxu0 0.0
  %129 = vmatprep.subr.mxu0 0.0
  %130 = vmatpush1.msra.mxu0 0.0
  %131 = vmatprep.subr.mxu0 0.0
  %132 = vmatpush1.msra.mxu0 0.0
  %133 = vmatprep.subr.mxu0 0.0
  %134 = vmatpush1.msra.mxu0 0.0
  %135 = vmatprep.subr.mxu0 0.0
  %136 = vmatpush1.msra.mxu0 0.0
  %137 = vmatprep.subr.mxu0 0.0
  %138 = vmatpush1.msra.mxu0 0.0
  %139 = vmatprep.subr.mxu0 0.0
  %140 = vmatpush1.msra.mxu0 0.0
  %141 = vmatprep.subr.mxu0 0.0
  %142 = vmatpush1.msra.mxu0 0.0
  %143 = vmatprep.subr.mxu0 0.0
  %144 = vmatpush1.msra.mxu0 0.0
  %145 = vmatprep.subr.mxu0 0.0
  %146 = vmatpush1.msra.mxu0 0.0
  %147 = vmatprep.subr.mxu0 0.0
  %148 = vmatpush1.msra.mxu0 0.0
  %149 = vmatprep.subr.mxu0 0.0
  %150 = vmatpush1.msra.mxu0 0.0
  %151 = vmatprep.subr.mxu0 0.0
  %152 = vmatpush1.msra.mxu0 0.0
  %153 = vmatprep.subr.mxu0 0.0
  %154 = vmatpush1.msra.mxu0 0.0
  %155 = vmatprep.subr.mxu0 0.0
  %156 = vmatpush1.msra.mxu0 0.0
  %157 = vmatprep.subr.mxu0 0.0
  %158 = vmatpush1.msra.mxu0 0.0
  %159 = vmatprep.subr.mxu0 0.0
  %160 = vmatpush1.msra.mxu0 0.0
  %161 = vmatprep.mubr.f32.mxu0 0.0
  %162 = vmatmul.mubr.f32.gmra.mrb[0].mxu0 %v50
  %v163 = vpop.f32.mrb[0].mxu0
  %v164 = vadd.f32 %v47, %v163
  %v165 = vpop.f32.mrb[0].mxu0
  %166 = vmatprep.mubr.f32.mxu0 0.0
  %167 = vmatmul.mubr.f32.gmra.mrb[0].mxu0 %v53
  %v168 = vpop.f32.mrb[0].mxu0
  %v169 = vadd.f32 %v47, %v168
  %v170 = vpop.f32.mrb[0].mxu0
  %171 = vmatprep.mubr.f32.mxu0 0.0
  %172 = vmatmul.mubr.f32.gmra.mrb[0].mxu0 %v56
  %v173 = vpop.f32.mrb[0].mxu0
  %v174 = vadd.f32 %v47, %v173
  %v175 = vpop.f32.mrb[0].mxu0
  %176 = vmatprep.mubr.f32.mxu0 0.0
  %177 = vmatmul.mubr.f32.gmra.mrb[0].mxu0 %v59
  %v178 = vpop.f32.mrb[0].mxu0
  %v179 = vadd.f32 %v47, %v178
  %v180 = vpop.f32.mrb[0].mxu0
  %181 = vmatprep.mubr.f32.mxu0 0.0
  %182 = vmatmul.mubr.f32.gmra.mrb[0].mxu0 %v62
  %v183 = vpop.f32.mrb[0].mxu0
  %v184 = vadd.f32 %v47, %v183
  %v185 = vpop.f32.mrb[0].mxu0
  %186 = vmatprep.mubr.f32.mxu0 0.0
  %187 = vmatmul.mubr.f32.gmra.mrb[0].mxu0 %v65
  %v188 = vpop.f32.mrb[0].mxu0
  %v189 = vadd.f32 %v47, %v188
  %v190 = vpop.f32.mrb[0].mxu0
  %191 = vmatprep.mubr.f32.mxu0 0.0
  %192 = vmatmul.mubr.f32.gmra.mrb[0].mxu0 %v68
  %v193 = vpop.f32.mrb[0].mxu0
  %v194 = vadd.f32 %v47, %v193
  %v195 = vpop.f32.mrb[0].mxu0
  %196 = vmatprep.mubr.f32.mxu0 0.0
  %197 = vmatmul.mubr.f32.gmra.mrb[0].mxu0 %v71
  %v198 = vpop.f32.mrb[0].mxu0
  %v199 = vadd.f32 %v47, %v198
  %v200 = vpop.f32.mrb[0].mxu0
  %201 = vmatprep.mubr.f32.mxu0 0.0
  %202 = vmatmul.mubr.f32.gmra.mrb[0].mxu0 %v74
  %v203 = vpop.f32.mrb[0].mxu0
  %v204 = vadd.f32 %v47, %v203
  %v205 = vpop.f32.mrb[0].mxu0
  %206 = vmatprep.mubr.f32.mxu0 0.0
  %207 = vmatmul.mubr.f32.gmra.mrb[0].mxu0 %v77
  %v208 = vpop.f32.mrb[0].mxu0
  %v209 = vadd.f32 %v47, %v208
  %v210 = vpop.f32.mrb[0].mxu0
  %211 = vmatprep.mubr.f32.mxu0 0.0
  %212 = vmatmul.mubr.f32.gmra.mrb[0].mxu0 %v80
  %v213 = vpop.f32.mrb[0].mxu0
  %v214 = vadd.f32 %v47, %v213
  %v215 = vpop.f32.mrb[0].mxu0
  %216 = vmatprep.mubr.f32.mxu0 0.0
  %217 = vmatmul.mubr.f32.gmra.mrb[0].mxu0 %v83
  %v218 = vpop.f32.mrb[0].mxu0
  %v219 = vadd.f32 %v47, %v218
  %v220 = vpop.f32.mrb[0].mxu0
  %221 = vmatprep.mubr.f32.mxu0 0.0
  %222 = vmatmul.mubr.f32.gmra.mrb[0].mxu0 %v86
  %v223 = vpop.f32.mrb[0].mxu0
  %v224 = vadd.f32 %v47, %v223
  %v225 = vpop.f32.mrb[0].mxu0
  %226 = vmatprep.mubr.f32.mxu0 0.0
  %227 = vmatmul.mubr.f32.gmra.mrb[0].mxu0 %v89
  %v228 = vpop.f32.mrb[0].mxu0
  %v229 = vadd.f32 %v47, %v228
  %v230 = vpop.f32.mrb[0].mxu0
  %231 = vmatprep.mubr.f32.mxu0 0.0
  %232 = vmatmul.mubr.f32.gmra.mrb[0].mxu0 %v92
  %v233 = vpop.f32.mrb[0].mxu0
  %v234 = vadd.f32 %v47, %v233
  %v235 = vpop.f32.mrb[0].mxu0
  %236 = vmatprep.mubr.f32.mxu0 0.0
  %237 = vmatmul.mubr.f32.gmra.mrb[0].mxu0 %v95
  %v238 = vpop.f32.mrb[0].mxu0
  %v239 = vadd.f32 %v47, %v238
  %v240 = vpop.f32.mrb[0].mxu0
  %241 = vdwg.mxu0
  %v242 = vmax.f32 %v164, 0.0
  %v243 = vmax.f32 %v169, 0.0
  %v244 = vmax.f32 %v174, 0.0
  %v245 = vmax.f32 %v179, 0.0
  %v246 = vmax.f32 %v184, 0.0
  %v247 = vmax.f32 %v189, 0.0
  %v248 = vmax.f32 %v194, 0.0
  %v249 = vmax.f32 %v199, 0.0
  %v250 = vmax.f32 %v204, 0.0
  %v251 = vmax.f32 %v209, 0.0
  %v252 = vmax.f32 %v214, 0.0
  %v253 = vmax.f32 %v219, 0.0
  %v254 = vmax.f32 %v224, 0.0
  %v255 = vmax.f32 %v229, 0.0
  %v256 = vmax.f32 %v234, 0.0
  %v257 = vmax.f32 %v239, 0.0
  %v258 = vld [vmem:[%s3] sm:$0xff]
  %v259 = vld [vmem:[%s3 + $0x8] sm:$0xff]
  %v260 = vld [vmem:[%s3 + $0x10] sm:$0xff]
  %v261 = vld [vmem:[%s3 + $0x18] sm:$0xff]
  %v262 = vld [vmem:[%s3 + $0x20] sm:$0xff]
  %v263 = vld [vmem:[%s3 + $0x28] sm:$0xff]
  %v264 = vld [vmem:[%s3 + $0x30] sm:$0xff]
  %v265 = vld [vmem:[%s3 + $0x38] sm:$0xff]
  %v266 = vld [vmem:[%s3 + $0x40] sm:$0xff]
  %v267 = vld [vmem:[%s3 + $0x48] sm:$0xff]
  %v268 = vld [vmem:[%s3 + $0x50] sm:$0xff]
  %v269 = vld [vmem:[%s3 + $0x58] sm:$0xff]
  %v270 = vld [vmem:[%s3 + $0x60] sm:$0xff]
  %v271 = vld [vmem:[%s3 + $0x68] sm:$0xff]
  %v272 = vld [vmem:[%s3 + $0x70] sm:$0xff]
  %v273 = vld [vmem:[%s3 + $0x78] sm:$0xff]
  %v274 = vld [vmem:[%s3 + $0x80] sm:$0xff]
  %v275 = vld [vmem:[%s3 + $0x88] sm:$0xff]
  %v276 = vld [vmem:[%s3 + $0x90] sm:$0xff]
  %v277 = vld [vmem:[%s3 + $0x98] sm:$0xff]
  %v278 = vld [vmem:[%s3 + $0xa0] sm:$0xff]
  %v279 = vld [vmem:[%s3 + $0xa8] sm:$0xff]
  %v280 = vld [vmem:[%s3 + $0xb0] sm:$0xff]
  %v281 = vld [vmem:[%s3 + $0xb8] sm:$0xff]
  %v282 = vld [vmem:[%s3 + $0xc0] sm:$0xff]
  %v283 = vld [vmem:[%s3 + $0xc8] sm:$0xff]
  %v284 = vld [vmem:[%s3 + $0xd0] sm:$0xff]
  %v285 = vld [vmem:[%s3 + $0xd8] sm:$0xff]
  %v286 = vld [vmem:[%s3 + $0xe0] sm:$0xff]
  %v287 = vld [vmem:[%s3 + $0xe8] sm:$0xff]
  %v288 = vld [vmem:[%s3 + $0xf0] sm:$0xff]
  %v289 = vld [vmem:[%s3 + $0xf8] sm:$0xff]
  %v290 = vld [vmem:[%s3 + $0x100] sm:$0xff]
  %v291 = vld [vmem:[%s3 + $0x108] sm:$0xff]
  %v292 = vld [vmem:[%s3 + $0x110] sm:$0xff]
  %v293 = vld [vmem:[%s3 + $0x118] sm:$0xff]
  %294 = vmatprep.subr.mxu0 0.0
  %295 = vmatpush1.msra.mxu0 %v242
  %296 = vmatprep.subr.mxu0 0.0
  %297 = vmatpush1.msra.mxu0 %v243
  %298 = vmatprep.subr.mxu0 0.0
  %299 = vmatpush1.msra.mxu0 %v244
  %300 = vmatprep.subr.mxu0 0.0
  %301 = vmatpush1.msra.mxu0 %v245
  %302 = vmatprep.subr.mxu0 0.0
  %303 = vmatpush1.msra.mxu0 %v246
  %304 = vmatprep.subr.mxu0 0.0
  %305 = vmatpush1.msra.mxu0 %v247
  %306 = vmatprep.subr.mxu0 0.0
  %307 = vmatpush1.msra.mxu0 %v248
  %308 = vmatprep.subr.mxu0 0.0
  %309 = vmatpush1.msra.mxu0 %v249
  %310 = vmatprep.subr.mxu0 0.0
  %311 = vmatpush1.msra.mxu0 %v250
  %312 = vmatprep.subr.mxu0 0.0
  %313 = vmatpush1.msra.mxu0 %v251
  %314 = vmatprep.subr.mxu0 0.0
  %315 = vmatpush1.msra.mxu0 %v252
  %316 = vmatprep.subr.mxu0 0.0
  %317 = vmatpush1.msra.mxu0 %v253
  %318 = vmatprep.subr.mxu0 0.0
  %319 = vmatpush1.msra.mxu0 %v254
  %320 = vmatprep.subr.mxu0 0.0
  %321 = vmatpush1.msra.mxu0 %v255
  %322 = vmatprep.subr.mxu0 0.0
  %323 = vmatpush1.msra.mxu0 %v256
  %324 = vmatprep.subr.mxu0 0.0
  %325 = vmatpush1.msra.mxu0 %v257
  %326 = vmatprep.subr.mxu0 0.0
  %327 = vmatpush1.msra.mxu0 0.0
  %328 = vmatprep.subr.mxu0 0.0
  %329 = vmatpush1.msra.mxu0 0.0
  %330 = vmatprep.subr.mxu0 0.0
  %331 = vmatpush1.msra.mxu0 0.0
  %332 = vmatprep.subr.mxu0 0.0
  %333 = vmatpush1.msra.mxu0 0.0
  %334 = vmatprep.subr.mxu0 0.0
  %335 = vmatpush1.msra.mxu0 0.0
  %336 = vmatprep.subr.mxu0 0.0
  %337 = vmatpush1.msra.mxu0 0.0
  %338 = vmatprep.subr.mxu0 0.0
  %339 = vmatpush1.msra.mxu0 0.0
  %340 = vmatprep.subr.mxu0 0.0
  %341 = vmatpush1.msra.mxu0 0.0
  %342 = vmatprep.subr.mxu0 0.0
  %343 = vmatpush1.msra.mxu0 0.0
  %344 = vmatprep.subr.mxu0 0.0
  %345 = vmatpush1.msra.mxu0 0.0
  %346 = vmatprep.subr.mxu0 0.0
  %347 = vmatpush1.msra.mxu0 0.0
  %348 = vmatprep.subr.mxu0 0.0
  %349 = vmatpush1.msra.mxu0 0.0
  %350 = vmatprep.subr.mxu0 0.0
  %351 = vmatpush1.msra.mxu0 0.0
  %352 = vmatprep.subr.mxu0 0.0
  %353 = vmatpush1.msra.mxu0 0.0
  %354 = vmatprep.subr.mxu0 0.0
  %355 = vmatpush1.msra.mxu0 0.0
  %356 = vmatprep.subr.mxu0 0.0
  %357 = vmatpush1.msra.mxu0 0.0
  %358 = vmatprep.mubr.f32.mxu0 0.0
  %359 = vmatmul.mubr.f32.gmra.mrb[0].mxu0 %v258
  %v360 = vpop.f32.mrb[0].mxu0
  %v361 = vadd.f32 0.0, %v360
  %v362 = vpop.f32.mrb[0].mxu0
  %363 = vmatprep.mubr.f32.mxu0 0.0
  %364 = vmatmul.mubr.f32.gmra.mrb[0].mxu0 %v259
  %v365 = vpop.f32.mrb[0].mxu0
  %v366 = vadd.f32 0.0, %v365
  %v367 = vpop.f32.mrb[0].mxu0
  %368 = vmatprep.mubr.f32.mxu0 0.0
  %369 = vmatmul.mubr.f32.gmra.mrb[0].mxu0 %v260
  %v370 = vpop.f32.mrb[0].mxu0
  %v371 = vadd.f32 0.0, %v370
  %v372 = vpop.f32.mrb[0].mxu0
  %373 = vmatprep.mubr.f32.mxu0 0.0
  %374 = vmatmul.mubr.f32.gmra.mrb[0].mxu0 %v261
  %v375 = vpop.f32.mrb[0].mxu0
  %v376 = vadd.f32 0.0, %v375
  %v377 = vpop.f32.mrb[0].mxu0
  %378 = vmatprep.mubr.f32.mxu0 0.0
  %379 = vmatmul.mubr.f32.gmra.mrb[0].mxu0 %v262
  %v380 = vpop.f32.mrb[0].mxu0
  %v381 = vadd.f32 0.0, %v380
  %v382 = vpop.f32.mrb[0].mxu0
  %383 = vmatprep.mubr.f32.mxu0 0.0
  %384 = vmatmul.mubr.f32.gmra.mrb[0].mxu0 %v263
  %v385 = vpop.f32.mrb[0].mxu0
  %v386 = vadd.f32 0.0, %v385
  %v387 = vpop.f32.mrb[0].mxu0
  %388 = vmatprep.mubr.f32.mxu0 0.0
  %389 = vmatmul.mubr.f32.gmra.mrb[0].mxu0 %v264
  %v390 = vpop.f32.mrb[0].mxu0
  %v391 = vadd.f32 0.0, %v390
  %v392 = vpop.f32.mrb[0].mxu0
  %393 = vmatprep.mubr.f32.mxu0 0.0
  %394 = vmatmul.mubr.f32.gmra.mrb[0].mxu0 %v265
  %v395 = vpop.f32.mrb[0].mxu0
  %v396 = vadd.f32 0.0, %v395
  %v397 = vpop.f32.mrb[0].mxu0
  %398 = vmatprep.mubr.f32.mxu0 0.0
  %399 = vmatmul.mubr.f32.gmra.mrb[0].mxu0 %v266
  %v400 = vpop.f32.mrb[0].mxu0
  %v401 = vadd.f32 0.0, %v400
  %v402 = vpop.f32.mrb[0].mxu0
  %403 = vmatprep.mubr.f32.mxu0 0.0
  %404 = vmatmul.mubr.f32.gmra.mrb[0].mxu0 %v267
  %v405 = vpop.f32.mrb[0].mxu0
  %v406 = vadd.f32 0.0, %v405
  %v407 = vpop.f32.mrb[0].mxu0
  %408 = vmatprep.mubr.f32.mxu0 0.0
  %409 = vmatmul.mubr.f32.gmra.mrb[0].mxu0 %v268
  %v410 = vpop.f32.mrb[0].mxu0
  %v411 = vadd.f32 0.0, %v410
  %v412 = vpop.f32.mrb[0].mxu0
  %413 = vmatprep.mubr.f32.mxu0 0.0
  %414 = vmatmul.mubr.f32.gmra.mrb[0].mxu0 %v269
  %v415 = vpop.f32.mrb[0].mxu0
  %v416 = vadd.f32 0.0, %v415
  %v417 = vpop.f32.mrb[0].mxu0
  %418 = vmatprep.mubr.f32.mxu0 0.0
  %419 = vmatmul.mubr.f32.gmra.mrb[0].mxu0 %v270
  %v420 = vpop.f32.mrb[0].mxu0
  %v421 = vadd.f32 0.0, %v420
  %v422 = vpop.f32.mrb[0].mxu0
  %423 = vmatprep.mubr.f32.mxu0 0.0
  %424 = vmatmul.mubr.f32.gmra.mrb[0].mxu0 %v271
  %v425 = vpop.f32.mrb[0].mxu0
  %v426 = vadd.f32 0.0, %v425
  %v427 = vpop.f32.mrb[0].mxu0
  %428 = vmatprep.mubr.f32.mxu0 0.0
  %429 = vmatmul.mubr.f32.gmra.mrb[0].mxu0 %v272
  %v430 = vpop.f32.mrb[0].mxu0
  %v431 = vadd.f32 0.0, %v430
  %v432 = vpop.f32.mrb[0].mxu0
  %433 = vmatprep.mubr.f32.mxu0 0.0
  %434 = vmatmul.mubr.f32.gmra.mrb[0].mxu0 %v273
  %v435 = vpop.f32.mrb[0].mxu0
  %v436 = vadd.f32 0.0, %v435
  %v437 = vpop.f32.mrb[0].mxu0
  %438 = vmatprep.mubr.f32.mxu0 0.0
  %439 = vmatmul.mubr.f32.gmra.mrb[0].mxu0 %v274
  %v440 = vpop.f32.mrb[0].mxu0
  %v441 = vadd.f32 0.0, %v440
  %v442 = vpop.f32.mrb[0].mxu0
  %443 = vmatprep.mubr.f32.mxu0 0.0
  %444 = vmatmul.mubr.f32.gmra.mrb[0].mxu0 %v275
  %v445 = vpop.f32.mrb[0].mxu0
  %v446 = vadd.f32 0.0, %v445
  %v447 = vpop.f32.mrb[0].mxu0
  %448 = vmatprep.mubr.f32.mxu0 0.0
  %449 = vmatmul.mubr.f32.gmra.mrb[0].mxu0 %v276
  %v450 = vpop.f32.mrb[0].mxu0
  %v451 = vadd.f32 0.0, %v450
  %v452 = vpop.f32.mrb[0].mxu0
  %453 = vmatprep.mubr.f32.mxu0 0.0
  %454 = vmatmul.mubr.f32.gmra.mrb[0].mxu0 %v277
  %v455 = vpop.f32.mrb[0].mxu0
  %v456 = vadd.f32 0.0, %v455
  %v457 = vpop.f32.mrb[0].mxu0
  %458 = vmatprep.mubr.f32.mxu0 0.0
  %459 = vmatmul.mubr.f32.gmra.mrb[0].mxu0 %v278
  %v460 = vpop.f32.mrb[0].mxu0
  %v461 = vadd.f32 0.0, %v460
  %v462 = vpop.f32.mrb[0].mxu0
  %463 = vmatprep.mubr.f32.mxu0 0.0
  %464 = vmatmul.mubr.f32.gmra.mrb[0].mxu0 %v279
  %v465 = vpop.f32.mrb[0].mxu0
  %v466 = vadd.f32 0.0, %v465
  %v467 = vpop.f32.mrb[0].mxu0
  %468 = vmatprep.mubr.f32.mxu0 0.0
  %469 = vmatmul.mubr.f32.gmra.mrb[0].mxu0 %v280
  %v470 = vpop.f32.mrb[0].mxu0
  %v471 = vadd.f32 0.0, %v470
  %v472 = vpop.f32.mrb[0].mxu0
  %473 = vmatprep.mubr.f32.mxu0 0.0
  %474 = vmatmul.mubr.f32.gmra.mrb[0].mxu0 %v281
  %v475 = vpop.f32.mrb[0].mxu0
  %v476 = vadd.f32 0.0, %v475
  %v477 = vpop.f32.mrb[0].mxu0
  %478 = vmatprep.mubr.f32.mxu0 0.0
  %479 = vmatmul.mubr.f32.gmra.mrb[0].mxu0 %v282
  %v480 = vpop.f32.mrb[0].mxu0
  %v481 = vadd.f32 0.0, %v480
  %v482 = vpop.f32.mrb[0].mxu0
  %483 = vmatprep.mubr.f32.mxu0 0.0
  %484 = vmatmul.mubr.f32.gmra.mrb[0].mxu0 %v283
  %v485 = vpop.f32.mrb[0].mxu0
  %v486 = vadd.f32 0.0, %v485
  %v487 = vpop.f32.mrb[0].mxu0
  %488 = vmatprep.mubr.f32.mxu0 0.0
  %489 = vmatmul.mubr.f32.gmra.mrb[0].mxu0 %v284
  %v490 = vpop.f32.mrb[0].mxu0
  %v491 = vadd.f32 0.0, %v490
  %v492 = vpop.f32.mrb[0].mxu0
  %493 = vmatprep.mubr.f32.mxu0 0.0
  %494 = vmatmul.mubr.f32.gmra.mrb[0].mxu0 %v285
  %v495 = vpop.f32.mrb[0].mxu0
  %v496 = vadd.f32 0.0, %v495
  %v497 = vpop.f32.mrb[0].mxu0
  %498 = vmatprep.mubr.f32.mxu0 0.0
  %499 = vmatmul.mubr.f32.gmra.mrb[0].mxu0 %v286
  %v500 = vpop.f32.mrb[0].mxu0
  %v501 = vadd.f32 0.0, %v500
  %v502 = vpop.f32.mrb[0].mxu0
  %503 = vmatprep.mubr.f32.mxu0 0.0
  %504 = vmatmul.mubr.f32.gmra.mrb[0].mxu0 %v287
  %v505 = vpop.f32.mrb[0].mxu0
  %v506 = vadd.f32 0.0, %v505
  %v507 = vpop.f32.mrb[0].mxu0
  %508 = vmatprep.mubr.f32.mxu0 0.0
  %509 = vmatmul.mubr.f32.gmra.mrb[0].mxu0 %v288
  %v510 = vpop.f32.mrb[0].mxu0
  %v511 = vadd.f32 0.0, %v510
  %v512 = vpop.f32.mrb[0].mxu0
  %513 = vmatprep.mubr.f32.mxu0 0.0
  %514 = vmatmul.mubr.f32.gmra.mrb[0].mxu0 %v289
  %v515 = vpop.f32.mrb[0].mxu0
  %v516 = vadd.f32 0.0, %v515
  %v517 = vpop.f32.mrb[0].mxu0
  %518 = vmatprep.mubr.f32.mxu0 0.0
  %519 = vmatmul.mubr.f32.gmra.mrb[0].mxu0 %v290
  %v520 = vpop.f32.mrb[0].mxu0
  %v521 = vadd.f32 0.0, %v520
  %v522 = vpop.f32.mrb[0].mxu0
  %523 = vmatprep.mubr.f32.mxu0 0.0
  %524 = vmatmul.mubr.f32.gmra.mrb[0].mxu0 %v291
  %v525 = vpop.f32.mrb[0].mxu0
  %v526 = vadd.f32 0.0, %v525
  %v527 = vpop.f32.mrb[0].mxu0
  %528 = vmatprep.mubr.f32.mxu0 0.0
  %529 = vmatmul.mubr.f32.gmra.mrb[0].mxu0 %v292
  %v530 = vpop.f32.mrb[0].mxu0
  %v531 = vadd.f32 0.0, %v530
  %v532 = vpop.f32.mrb[0].mxu0
  %533 = vmatprep.mubr.f32.mxu0 0.0
  %534 = vmatmul.mubr.f32.gmra.mrb[0].mxu0 %v293
  %v535 = vpop.f32.mrb[0].mxu0
  %v536 = vadd.f32 0.0, %v535
  %v537 = vpop.f32.mrb[0].mxu0
  %538 = vdwg.mxu0
  %543 = vrot.lane.b32.xlu0 %v381, 16
  %v544 = vpop.permute.xlu0 %543
  %545 = vrot.lane.b32.xlu0 %v386, 16
  %v546 = vpop.permute.xlu0 %545
  %547 = vrot.lane.b32.xlu0 %v391, 16
  %v548 = vpop.permute.xlu0 %547
  %549 = vrot.lane.b32.xlu0 %v396, 16
  %v550 = vpop.permute.xlu0 %549
  %559 = vrot.lane.b32.xlu0 %v401, 32
  %v560 = vpop.permute.xlu0 %559
  %561 = vrot.lane.b32.xlu0 %v406, 32
  %v562 = vpop.permute.xlu0 %561
  %563 = vrot.lane.b32.xlu0 %v411, 32
  %v564 = vpop.permute.xlu0 %563
  %565 = vrot.lane.b32.xlu0 %v416, 32
  %v566 = vpop.permute.xlu0 %565
  %575 = vrot.lane.b32.xlu0 %v421, 48
  %v576 = vpop.permute.xlu0 %575
  %577 = vrot.lane.b32.xlu0 %v426, 48
  %v578 = vpop.permute.xlu0 %577
  %579 = vrot.lane.b32.xlu0 %v431, 48
  %v580 = vpop.permute.xlu0 %579
  %581 = vrot.lane.b32.xlu0 %v436, 48
  %v582 = vpop.permute.xlu0 %581
  %591 = vrot.lane.b32.xlu0 %v441, 64
  %v592 = vpop.permute.xlu0 %591
  %593 = vrot.lane.b32.xlu0 %v446, 64
  %v594 = vpop.permute.xlu0 %593
  %595 = vrot.lane.b32.xlu0 %v451, 64
  %v596 = vpop.permute.xlu0 %595
  %597 = vrot.lane.b32.xlu0 %v456, 64
  %v598 = vpop.permute.xlu0 %597
  %607 = vrot.lane.b32.xlu0 %v461, 80
  %v608 = vpop.permute.xlu0 %607
  %609 = vrot.lane.b32.xlu0 %v466, 80
  %v610 = vpop.permute.xlu0 %609
  %611 = vrot.lane.b32.xlu0 %v471, 80
  %v612 = vpop.permute.xlu0 %611
  %613 = vrot.lane.b32.xlu0 %v476, 80
  %v614 = vpop.permute.xlu0 %613
  %623 = vrot.lane.b32.xlu0 %v481, 96
  %v624 = vpop.permute.xlu0 %623
  %625 = vrot.lane.b32.xlu0 %v486, 96
  %v626 = vpop.permute.xlu0 %625
  %627 = vrot.lane.b32.xlu0 %v491, 96
  %v628 = vpop.permute.xlu0 %627
  %629 = vrot.lane.b32.xlu0 %v496, 96
  %v630 = vpop.permute.xlu0 %629
  %639 = vrot.lane.b32.xlu0 %v501, 112
  %v640 = vpop.permute.xlu0 %639
  %641 = vrot.lane.b32.xlu0 %v506, 112
  %v642 = vpop.permute.xlu0 %641
  %643 = vrot.lane.b32.xlu0 %v511, 112
  %v644 = vpop.permute.xlu0 %643
  %645 = vrot.lane.b32.xlu0 %v516, 112
  %v646 = vpop.permute.xlu0 %645
  %vm651 = vcmask 130048
  %v652 = vsel %vm651, %v361, %v544
  %v653 = vsel %vm651, %v366, %v546
  %v654 = vsel %vm651, %v371, %v548
  %v655 = vsel %vm651, %v376, %v550
  %v656 = vsel %vm48, %v652, %v560
  %v657 = vsel %vm48, %v653, %v562
  %v658 = vsel %vm48, %v654, %v564
  %v659 = vsel %vm48, %v655, %v566
  %vm660 = vcmask 392192
  %v661 = vsel %vm660, %v656, %v576
  %v662 = vsel %vm660, %v657, %v578
  %v663 = vsel %vm660, %v658, %v580
  %v664 = vsel %vm660, %v659, %v582
  %vm665 = vcmask 523264
  %v666 = vsel %vm665, %v661, %v592
  %v667 = vsel %vm665, %v662, %v594
  %v668 = vsel %vm665, %v663, %v596
  %v669 = vsel %vm665, %v664, %v598
  %vm670 = vcmask 654336
  %v671 = vsel %vm670, %v666, %v608
  %v672 = vsel %vm670, %v667, %v610
  %v673 = vsel %vm670, %v668, %v612
  %v674 = vsel %vm670, %v669, %v614
  %vm675 = vcmask 785408
  %v676 = vsel %vm675, %v671, %v624
  %v677 = vsel %vm675, %v672, %v626
  %v678 = vsel %vm675, %v673, %v628
  %v679 = vsel %vm675, %v674, %v630
  %vm680 = vcmask 916480
  %v681 = vsel %vm680, %v676, %v640
  %v682 = vsel %vm680, %v677, %v642
  %v683 = vsel %vm680, %v678, %v644
  %v684 = vsel %vm680, %v679, %v646
  %v685 = vld [vmem:[%s4 + $0x20] sm:$0xff]
  %v686 = vld [vmem:[%s4 + $0x28] sm:$0xff]
  %v687 = vld [vmem:[%s4 + $0x30] sm:$0xff]
  %v688 = vld [vmem:[%s4 + $0x38] sm:$0xff]
  %v689 = vld [vmem:[%s4 + $0x40] sm:$0xff]
  %v690 = vld [vmem:[%s4 + $0x48] sm:$0xff]
  %v691 = vld [vmem:[%s4 + $0x50] sm:$0xff]
  %v692 = vld [vmem:[%s4 + $0x58] sm:$0xff]
  %v693 = vld [vmem:[%s4 + $0x60] sm:$0xff]
  %v694 = vld [vmem:[%s4 + $0x68] sm:$0xff]
  %v695 = vld [vmem:[%s4 + $0x70] sm:$0xff]
  %v696 = vld [vmem:[%s4 + $0x78] sm:$0xff]
  %v697 = vld [vmem:[%s4 + $0x80] sm:$0xff]
  %v698 = vld [vmem:[%s4 + $0x88] sm:$0xff]
  %v699 = vld [vmem:[%s4 + $0x90] sm:$0xff]
  %v700 = vld [vmem:[%s4 + $0x98] sm:$0xff]
  %v701 = vld [vmem:[%s4 + $0xa0] sm:$0xff]
  %v702 = vld [vmem:[%s4 + $0xa8] sm:$0xff]
  %v703 = vlaneseq
  %v704 = vshrl.u32 %v703, 7
  %v705 = vsub.s32 1, %v704
  %v706 = vrot.slane %v23, %v705
  %v708 = vsel %vm651, %v521, 0
  %v711 = vsel %vm651, %v526, 0
  %v714 = vsel %vm651, %v531, 0
  %v717 = vsel %vm651, %v536, 0
  %719 = vmatprep.subr.mxu0 0.0
  %720 = vmatpush1.msra.mxu0 %v685
  %721 = vmatprep.subr.mxu0 0.0
  %722 = vmatpush1.msra.mxu0 %v686
  %723 = vmatprep.subr.mxu0 0.0
  %724 = vmatpush1.msra.mxu0 %v687
  %725 = vmatprep.subr.mxu0 0.0
  %726 = vmatpush1.msra.mxu0 %v688
  %727 = vmatprep.subr.mxu0 0.0
  %728 = vmatpush1.msra.mxu0 %v689
  %729 = vmatprep.subr.mxu0 0.0
  %730 = vmatpush1.msra.mxu0 %v690
  %731 = vmatprep.subr.mxu0 0.0
  %732 = vmatpush1.msra.mxu0 %v691
  %733 = vmatprep.subr.mxu0 0.0
  %734 = vmatpush1.msra.mxu0 %v692
  %735 = vmatprep.subr.mxu0 0.0
  %736 = vmatpush1.msra.mxu0 %v693
  %737 = vmatprep.subr.mxu0 0.0
  %738 = vmatpush1.msra.mxu0 %v694
  %739 = vmatprep.subr.mxu0 0.0
  %740 = vmatpush1.msra.mxu0 %v695
  %741 = vmatprep.subr.mxu0 0.0
  %742 = vmatpush1.msra.mxu0 %v696
  %743 = vmatprep.subr.mxu0 0.0
  %744 = vmatpush1.msra.mxu0 %v697
  %745 = vmatprep.subr.mxu0 0.0
  %746 = vmatpush1.msra.mxu0 %v698
  %747 = vmatprep.subr.mxu0 0.0
  %748 = vmatpush1.msra.mxu0 %v699
  %749 = vmatprep.subr.mxu0 0.0
  %750 = vmatpush1.msra.mxu0 %v700
  %751 = vmatprep.subr.mxu0 0.0
  %752 = vmatpush1.msra.mxu0 %v701
  %753 = vmatprep.subr.mxu0 0.0
  %754 = vmatpush1.msra.mxu0 %v702
  %755 = vmatprep.subr.mxu0 0.0
  %756 = vmatpush1.msra.mxu0 0.0
  %757 = vmatprep.subr.mxu0 0.0
  %758 = vmatpush1.msra.mxu0 0.0
  %759 = vmatprep.subr.mxu0 0.0
  %760 = vmatpush1.msra.mxu0 0.0
  %761 = vmatprep.subr.mxu0 0.0
  %762 = vmatpush1.msra.mxu0 0.0
  %763 = vmatprep.subr.mxu0 0.0
  %764 = vmatpush1.msra.mxu0 0.0
  %765 = vmatprep.subr.mxu0 0.0
  %766 = vmatpush1.msra.mxu0 0.0
  %767 = vmatprep.subr.mxu0 0.0
  %768 = vmatpush1.msra.mxu0 0.0
  %769 = vmatprep.subr.mxu0 0.0
  %770 = vmatpush1.msra.mxu0 0.0
  %771 = vmatprep.subr.mxu0 0.0
  %772 = vmatpush1.msra.mxu0 0.0
  %773 = vmatprep.subr.mxu0 0.0
  %774 = vmatpush1.msra.mxu0 0.0
  %775 = vmatprep.subr.mxu0 0.0
  %776 = vmatpush1.msra.mxu0 0.0
  %777 = vmatprep.subr.mxu0 0.0
  %778 = vmatpush1.msra.mxu0 0.0
  %779 = vmatprep.subr.mxu0 0.0
  %780 = vmatpush1.msra.mxu0 0.0
  %781 = vmatprep.subr.mxu0 0.0
  %782 = vmatpush1.msra.mxu0 0.0
  %783 = vmatprep.mubr.f32.mxu0 %v708
  %784 = vmatmul.mubr.f32.gmra.mrb[0].mxu0 %v681
  %v785 = vpop.f32.mrb[0].mxu0
  %v786 = vadd.f32 %v706, %v785
  %v787 = vpop.f32.mrb[0].mxu0
  %788 = vmatprep.mubr.f32.mxu0 %v711
  %789 = vmatmul.mubr.f32.gmra.mrb[0].mxu0 %v682
  %v790 = vpop.f32.mrb[0].mxu0
  %v791 = vadd.f32 %v706, %v790
  %v792 = vpop.f32.mrb[0].mxu0
  %793 = vmatprep.mubr.f32.mxu0 %v714
  %794 = vmatmul.mubr.f32.gmra.mrb[0].mxu0 %v683
  %v795 = vpop.f32.mrb[0].mxu0
  %v796 = vadd.f32 %v706, %v795
  %v797 = vpop.f32.mrb[0].mxu0
  %798 = vmatprep.mubr.f32.mxu0 %v717
  %799 = vmatmul.mubr.f32.gmra.mrb[0].mxu0 %v684
  %v800 = vpop.f32.mrb[0].mxu0
  %v801 = vadd.f32 %v706, %v800
  %v802 = vpop.f32.mrb[0].mxu0
  %803 = vdwg.mxu0
  %v804 = vmax.f32 %v786, 0.0
  %v805 = vmax.f32 %v791, 0.0
  %v806 = vmax.f32 %v796, 0.0
  %v807 = vmax.f32 %v801, 0.0
  %v809 = vrot.slane %v804, 2
  %810 = vrot.lane.b32.xlu0 %v809, 32
  %v811 = vpop.permute.xlu0 %810
  %v813 = vrot.slane %v804, 4
  %814 = vrot.lane.b32.xlu0 %v813, 64
  %v815 = vpop.permute.xlu0 %814
  %v817 = vrot.slane %v804, 6
  %818 = vrot.lane.b32.xlu0 %v817, 96
  %v819 = vpop.permute.xlu0 %818
  %v822 = vrot.slane %v805, 2
  %823 = vrot.lane.b32.xlu0 %v822, 32
  %v824 = vpop.permute.xlu0 %823
  %v826 = vrot.slane %v805, 4
  %827 = vrot.lane.b32.xlu0 %v826, 64
  %v828 = vpop.permute.xlu0 %827
  %v830 = vrot.slane %v805, 6
  %831 = vrot.lane.b32.xlu0 %v830, 96
  %v832 = vpop.permute.xlu0 %831
  %v835 = vrot.slane %v806, 2
  %836 = vrot.lane.b32.xlu0 %v835, 32
  %v837 = vpop.permute.xlu0 %836
  %v839 = vrot.slane %v806, 4
  %840 = vrot.lane.b32.xlu0 %v839, 64
  %v841 = vpop.permute.xlu0 %840
  %v843 = vrot.slane %v806, 6
  %844 = vrot.lane.b32.xlu0 %v843, 96
  %v845 = vpop.permute.xlu0 %844
  %v848 = vrot.slane %v807, 2
  %849 = vrot.lane.b32.xlu0 %v848, 32
  %v850 = vpop.permute.xlu0 %849
  %v852 = vrot.slane %v807, 4
  %853 = vrot.lane.b32.xlu0 %v852, 64
  %v854 = vpop.permute.xlu0 %853
  %v856 = vrot.slane %v807, 6
  %857 = vrot.lane.b32.xlu0 %v856, 96
  %v858 = vpop.permute.xlu0 %857
  %v860 = vsel %vm48, %v804, %v811
  %v861 = vsel %vm665, %v860, %v815
  %v862 = vsel %vm675, %v861, %v819
  %v863 = vsel %vm48, %v805, %v824
  %v864 = vsel %vm665, %v863, %v828
  %v865 = vsel %vm675, %v864, %v832
  %v866 = vsel %vm48, %v806, %v837
  %v867 = vsel %vm665, %v866, %v841
  %v868 = vsel %vm675, %v867, %v845
  %v869 = vsel %vm48, %v807, %v850
  %v870 = vsel %vm665, %v869, %v854
  %v871 = vsel %vm675, %v870, %v858
  %v872 = vld [vmem:[%s4 + $0xb0] sm:$0xff]
  %v873 = vld [vmem:[%s4 + $0xb8] sm:$0xff]
  %v874 = vld [vmem:[%s4 + $0xc0] sm:$0xff]
  %v875 = vld [vmem:[%s4 + $0xc8] sm:$0xff]
  %v876 = vld [vmem:[%s4 + $0xd0] sm:$0xff]
  %v877 = vld [vmem:[%s4 + $0xd8] sm:$0xff]
  %v878 = vld [vmem:[%s4 + $0xe0] sm:$0xff]
  %v879 = vld [vmem:[%s4 + $0xe8] sm:$0xff]
  %v880 = vld [vmem:[%s4 + $0xf0] sm:$0xff]
  %v881 = vld [vmem:[%s4 + $0xf8] sm:$0xff]
  %v882 = vld [vmem:[%s4 + $0x100] sm:$0xff]
  %v883 = vld [vmem:[%s4 + $0x108] sm:$0xff]
  %v884 = vld [vmem:[%s4 + $0x110] sm:$0xff]
  %v885 = vld [vmem:[%s4 + $0x118] sm:$0xff]
  %v886 = vld [vmem:[%s4 + $0x120] sm:$0xff]
  %v887 = vld [vmem:[%s4 + $0x128] sm:$0xff]
  %v888 = vld [vmem:[%s4 + $0x130] sm:$0xff]
  %v889 = vld [vmem:[%s4 + $0x138] sm:$0xff]
  %v890 = vld [vmem:[%s4 + $0x140] sm:$0xff]
  %v891 = vld [vmem:[%s4 + $0x148] sm:$0xff]
  %v892 = vld [vmem:[%s4 + $0x150] sm:$0xff]
  %v893 = vld [vmem:[%s4 + $0x158] sm:$0xff]
  %v894 = vld [vmem:[%s4 + $0x160] sm:$0xff]
  %v895 = vld [vmem:[%s4 + $0x168] sm:$0xff]
  %v896 = vld [vmem:[%s4 + $0x170] sm:$0xff]
  %v897 = vld [vmem:[%s4 + $0x178] sm:$0xff]
  %v898 = vld [vmem:[%s4 + $0x180] sm:$0xff]
  %v899 = vld [vmem:[%s4 + $0x188] sm:$0xff]
  %v900 = vld [vmem:[%s4 + $0x190] sm:$0xff]
  %v901 = vld [vmem:[%s4 + $0x198] sm:$0xff]
  %v902 = vld [vmem:[%s4 + $0x1a0] sm:$0xff]
  %v903 = vld [vmem:[%s4 + $0x1a8] sm:$0xff]
  %v904 = vld [vmem:[%s4 + $0x1b0] sm:$0xff]
  %v905 = vld [vmem:[%s4 + $0x1b8] sm:$0xff]
  %v906 = vld [vmem:[%s4 + $0x1c0] sm:$0xff]
  %v907 = vld [vmem:[%s4 + $0x1c8] sm:$0xff]
  %v908 = vld [vmem:[%s4 + $0x1d0] sm:$0xff]
  %v909 = vld [vmem:[%s4 + $0x1d8] sm:$0xff]
  %v910 = vld [vmem:[%s4 + $0x1e0] sm:$0xff]
  %v911 = vld [vmem:[%s4 + $0x1e8] sm:$0xff]
  %v912 = vld [vmem:[%s4 + $0x1f0] sm:$0xff]
  %v913 = vld [vmem:[%s4 + $0x1f8] sm:$0xff]
  %v914 = vld [vmem:[%s4 + $0x200] sm:$0xff]
  %v915 = vld [vmem:[%s4 + $0x208] sm:$0xff]
  %v916 = vld [vmem:[%s4 + $0x210] sm:$0xff]
  %v917 = vld [vmem:[%s4 + $0x218] sm:$0xff]
  %v918 = vld [vmem:[%s4 + $0x220] sm:$0xff]
  %v919 = vld [vmem:[%s4 + $0x228] sm:$0xff]
  %v920 = vld [vmem:[%s4 + $0x230] sm:$0xff]
  %v921 = vld [vmem:[%s4 + $0x238] sm:$0xff]
  %v922 = vld [vmem:[%s4 + $0x240] sm:$0xff]
  %v923 = vld [vmem:[%s4 + $0x248] sm:$0xff]
  %v924 = vld [vmem:[%s4 + $0x250] sm:$0xff]
  %v925 = vld [vmem:[%s4 + $0x258] sm:$0xff]
  %v926 = vld [vmem:[%s4 + $0x260] sm:$0xff]
  %v927 = vld [vmem:[%s4 + $0x268] sm:$0xff]
  %v928 = vld [vmem:[%s4 + $0x270] sm:$0xff]
  %v929 = vld [vmem:[%s4 + $0x278] sm:$0xff]
  %v930 = vld [vmem:[%s4 + $0x280] sm:$0xff]
  %v931 = vld [vmem:[%s4 + $0x288] sm:$0xff]
  %v932 = vld [vmem:[%s4 + $0x290] sm:$0xff]
  %v933 = vld [vmem:[%s4 + $0x298] sm:$0xff]
  %v934 = vld [vmem:[%s4 + $0x2a0] sm:$0xff]
  %v935 = vld [vmem:[%s4 + $0x2a8] sm:$0xff]
  %v936 = vlaneseq
  %v937 = vshrl.u32 %v936, 7
  %v938 = vsub.s32 2, %v937
  %v939 = vrot.slane %v23, %v938
  %940 = vmatprep.subr.mxu0 0.0
  %941 = vmatpush1.msra.mxu0 %v872
  %942 = vmatprep.subr.mxu0 0.0
  %943 = vmatpush1.msra.mxu0 %v873
  %944 = vmatprep.subr.mxu0 0.0
  %945 = vmatpush1.msra.mxu0 %v874
  %946 = vmatprep.subr.mxu0 0.0
  %947 = vmatpush1.msra.mxu0 %v875
  %948 = vmatprep.subr.mxu0 0.0
  %949 = vmatpush1.msra.mxu0 %v876
  %950 = vmatprep.subr.mxu0 0.0
  %951 = vmatpush1.msra.mxu0 %v877
  %952 = vmatprep.subr.mxu0 0.0
  %953 = vmatpush1.msra.mxu0 %v878
  %954 = vmatprep.subr.mxu0 0.0
  %955 = vmatpush1.msra.mxu0 %v879
  %956 = vmatprep.subr.mxu0 0.0
  %957 = vmatpush1.msra.mxu0 %v880
  %958 = vmatprep.subr.mxu0 0.0
  %959 = vmatpush1.msra.mxu0 %v881
  %960 = vmatprep.subr.mxu0 0.0
  %961 = vmatpush1.msra.mxu0 %v882
  %962 = vmatprep.subr.mxu0 0.0
  %963 = vmatpush1.msra.mxu0 %v883
  %964 = vmatprep.subr.mxu0 0.0
  %965 = vmatpush1.msra.mxu0 %v884
  %966 = vmatprep.subr.mxu0 0.0
  %967 = vmatpush1.msra.mxu0 %v885
  %968 = vmatprep.subr.mxu0 0.0
  %969 = vmatpush1.msra.mxu0 %v886
  %970 = vmatprep.subr.mxu0 0.0
  %971 = vmatpush1.msra.mxu0 %v887
  %972 = vmatprep.subr.mxu0 0.0
  %973 = vmatpush1.msra.mxu0 %v888
  %974 = vmatprep.subr.mxu0 0.0
  %975 = vmatpush1.msra.mxu0 %v889
  %976 = vmatprep.subr.mxu0 0.0
  %977 = vmatpush1.msra.mxu0 %v890
  %978 = vmatprep.subr.mxu0 0.0
  %979 = vmatpush1.msra.mxu0 %v891
  %980 = vmatprep.subr.mxu0 0.0
  %981 = vmatpush1.msra.mxu0 %v892
  %982 = vmatprep.subr.mxu0 0.0
  %983 = vmatpush1.msra.mxu0 %v893
  %984 = vmatprep.subr.mxu0 0.0
  %985 = vmatpush1.msra.mxu0 %v894
  %986 = vmatprep.subr.mxu0 0.0
  %987 = vmatpush1.msra.mxu0 %v895
  %988 = vmatprep.subr.mxu0 0.0
  %989 = vmatpush1.msra.mxu0 %v896
  %990 = vmatprep.subr.mxu0 0.0
  %991 = vmatpush1.msra.mxu0 %v897
  %992 = vmatprep.subr.mxu0 0.0
  %993 = vmatpush1.msra.mxu0 %v898
  %994 = vmatprep.subr.mxu0 0.0
  %995 = vmatpush1.msra.mxu0 %v899
  %996 = vmatprep.subr.mxu0 0.0
  %997 = vmatpush1.msra.mxu0 %v900
  %998 = vmatprep.subr.mxu0 0.0
  %999 = vmatpush1.msra.mxu0 %v901
  %1000 = vmatprep.subr.mxu0 0.0
  %1001 = vmatpush1.msra.mxu0 %v902
  %1002 = vmatprep.subr.mxu0 0.0
  %1003 = vmatpush1.msra.mxu0 %v903
  %1004 = vmatprep.mubr.f32.mxu0 %v865
  %1005 = vmatmul.mubr.f32.gmra.mrb[0].mxu0 %v862
  %v1006 = vpop.f32.mrb[0].mxu0
  %v1007 = vadd.f32 %v939, %v1006
  %v1008 = vpop.f32.mrb[0].mxu0
  %1009 = vdwg.mxu0
  %1010 = vmatprep.subr.mxu0 0.0
  %1011 = vmatpush1.msra.mxu0 %v904
  %1012 = vmatprep.subr.mxu0 0.0
  %1013 = vmatpush1.msra.mxu0 %v905
  %1014 = vmatprep.subr.mxu0 0.0
  %1015 = vmatpush1.msra.mxu0 %v906
  %1016 = vmatprep.subr.mxu0 0.0
  %1017 = vmatpush1.msra.mxu0 %v907
  %1018 = vmatprep.subr.mxu0 0.0
  %1019 = vmatpush1.msra.mxu0 %v908
  %1020 = vmatprep.subr.mxu0 0.0
  %1021 = vmatpush1.msra.mxu0 %v909
  %1022 = vmatprep.subr.mxu0 0.0
  %1023 = vmatpush1.msra.mxu0 %v910
  %1024 = vmatprep.subr.mxu0 0.0
  %1025 = vmatpush1.msra.mxu0 %v911
  %1026 = vmatprep.subr.mxu0 0.0
  %1027 = vmatpush1.msra.mxu0 %v912
  %1028 = vmatprep.subr.mxu0 0.0
  %1029 = vmatpush1.msra.mxu0 %v913
  %1030 = vmatprep.subr.mxu0 0.0
  %1031 = vmatpush1.msra.mxu0 %v914
  %1032 = vmatprep.subr.mxu0 0.0
  %1033 = vmatpush1.msra.mxu0 %v915
  %1034 = vmatprep.subr.mxu0 0.0
  %1035 = vmatpush1.msra.mxu0 %v916
  %1036 = vmatprep.subr.mxu0 0.0
  %1037 = vmatpush1.msra.mxu0 %v917
  %1038 = vmatprep.subr.mxu0 0.0
  %1039 = vmatpush1.msra.mxu0 %v918
  %1040 = vmatprep.subr.mxu0 0.0
  %1041 = vmatpush1.msra.mxu0 %v919
  %1042 = vmatprep.subr.mxu0 0.0
  %1043 = vmatpush1.msra.mxu0 %v920
  %1044 = vmatprep.subr.mxu0 0.0
  %1045 = vmatpush1.msra.mxu0 %v921
  %1046 = vmatprep.subr.mxu0 0.0
  %1047 = vmatpush1.msra.mxu0 %v922
  %1048 = vmatprep.subr.mxu0 0.0
  %1049 = vmatpush1.msra.mxu0 %v923
  %1050 = vmatprep.subr.mxu0 0.0
  %1051 = vmatpush1.msra.mxu0 %v924
  %1052 = vmatprep.subr.mxu0 0.0
  %1053 = vmatpush1.msra.mxu0 %v925
  %1054 = vmatprep.subr.mxu0 0.0
  %1055 = vmatpush1.msra.mxu0 %v926
  %1056 = vmatprep.subr.mxu0 0.0
  %1057 = vmatpush1.msra.mxu0 %v927
  %1058 = vmatprep.subr.mxu0 0.0
  %1059 = vmatpush1.msra.mxu0 %v928
  %1060 = vmatprep.subr.mxu0 0.0
  %1061 = vmatpush1.msra.mxu0 %v929
  %1062 = vmatprep.subr.mxu0 0.0
  %1063 = vmatpush1.msra.mxu0 %v930
  %1064 = vmatprep.subr.mxu0 0.0
  %1065 = vmatpush1.msra.mxu0 %v931
  %1066 = vmatprep.subr.mxu0 0.0
  %1067 = vmatpush1.msra.mxu0 %v932
  %1068 = vmatprep.subr.mxu0 0.0
  %1069 = vmatpush1.msra.mxu0 %v933
  %1070 = vmatprep.subr.mxu0 0.0
  %1071 = vmatpush1.msra.mxu0 %v934
  %1072 = vmatprep.subr.mxu0 0.0
  %1073 = vmatpush1.msra.mxu0 %v935
  %1074 = vmatprep.mubr.f32.mxu0 %v871
  %1075 = vmatmul.mubr.f32.gmra.mrb[0].mxu0 %v868
  %v1076 = vpop.f32.mrb[0].mxu0
  %v1077 = vadd.f32 %v1007, %v1076
  %v1078 = vpop.f32.mrb[0].mxu0
  %1079 = vdwg.mxu0
  %v1080 = vmax.f32 %v1077, 0.0
  %vm1081 = vcmask 517120
  %v1082 = vsel %vm1081, %v1080, 0.0
  %1083 = vadd.xlane.f32.xlu0 %v1082
  %v1084 = vpop.xlane.xlu0 %1083
  %v1085 = vrcp.pop 64.0
  %v1086 = vmul.f32 %v1084, %v1085
  %v1087 = vsub.f32 %v1080, %v1086
  %v1088 = vmul.f32 %v1087, %v1087
  %v1089 = vsel %vm1081, %v1088, 0.0
  %1090 = vadd.xlane.f32.xlu0 %v1089
  %v1091 = vpop.xlane.xlu0 %1090
  %v1092 = vmul.f32 %v1091, 0.015873017
  %v1093 = vmax.f32 %v1092, 1e-12
  %v1094 = vrsqrt.pop %v1093
  %v1095 = vmul.f32 %v1087, %v1094
  %v1096 = vld [vmem:[%s4 + $0x2b0] sm:$0xff]
  %v1097 = vld [vmem:[%s4 + $0x2b8] sm:$0xff]
  %v1098 = vld [vmem:[%s4 + $0x2c0] sm:$0xff]
  %v1099 = vld [vmem:[%s4 + $0x2c8] sm:$0xff]
  %v1100 = vld [vmem:[%s4 + $0x2d0] sm:$0xff]
  %v1101 = vld [vmem:[%s4 + $0x2d8] sm:$0xff]
  %v1102 = vld [vmem:[%s4 + $0x2e0] sm:$0xff]
  %v1103 = vld [vmem:[%s4 + $0x2e8] sm:$0xff]
  %v1104 = vlaneseq
  %v1105 = vshrl.u32 %v1104, 7
  %v1106 = vsub.s32 3, %v1105
  %v1107 = vrot.slane %v23, %v1106
  %v1109 = vsel %vm665, %v1095, 0
  %1111 = vmatprep.subr.mxu0 0.0
  %1112 = vmatpush1.msra.mxu0 %v1096
  %1113 = vmatprep.subr.mxu0 0.0
  %1114 = vmatpush1.msra.mxu0 %v1097
  %1115 = vmatprep.subr.mxu0 0.0
  %1116 = vmatpush1.msra.mxu0 %v1098
  %1117 = vmatprep.subr.mxu0 0.0
  %1118 = vmatpush1.msra.mxu0 %v1099
  %1119 = vmatprep.subr.mxu0 0.0
  %1120 = vmatpush1.msra.mxu0 %v1100
  %1121 = vmatprep.subr.mxu0 0.0
  %1122 = vmatpush1.msra.mxu0 %v1101
  %1123 = vmatprep.subr.mxu0 0.0
  %1124 = vmatpush1.msra.mxu0 %v1102
  %1125 = vmatprep.subr.mxu0 0.0
  %1126 = vmatpush1.msra.mxu0 %v1103
  %1127 = vmatprep.subr.mxu0 0.0
  %1128 = vmatpush1.msra.mxu0 0.0
  %1129 = vmatprep.subr.mxu0 0.0
  %1130 = vmatpush1.msra.mxu0 0.0
  %1131 = vmatprep.subr.mxu0 0.0
  %1132 = vmatpush1.msra.mxu0 0.0
  %1133 = vmatprep.subr.mxu0 0.0
  %1134 = vmatpush1.msra.mxu0 0.0
  %1135 = vmatprep.subr.mxu0 0.0
  %1136 = vmatpush1.msra.mxu0 0.0
  %1137 = vmatprep.subr.mxu0 0.0
  %1138 = vmatpush1.msra.mxu0 0.0
  %1139 = vmatprep.subr.mxu0 0.0
  %1140 = vmatpush1.msra.mxu0 0.0
  %1141 = vmatprep.subr.mxu0 0.0
  %1142 = vmatpush1.msra.mxu0 0.0
  %1143 = vmatprep.subr.mxu0 0.0
  %1144 = vmatpush1.msra.mxu0 0.0
  %1145 = vmatprep.subr.mxu0 0.0
  %1146 = vmatpush1.msra.mxu0 0.0
  %1147 = vmatprep.subr.mxu0 0.0
  %1148 = vmatpush1.msra.mxu0 0.0
  %1149 = vmatprep.subr.mxu0 0.0
  %1150 = vmatpush1.msra.mxu0 0.0
  %1151 = vmatprep.subr.mxu0 0.0
  %1152 = vmatpush1.msra.mxu0 0.0
  %1153 = vmatprep.subr.mxu0 0.0
  %1154 = vmatpush1.msra.mxu0 0.0
  %1155 = vmatprep.subr.mxu0 0.0
  %1156 = vmatpush1.msra.mxu0 0.0
  %1157 = vmatprep.subr.mxu0 0.0
  %1158 = vmatpush1.msra.mxu0 0.0
  %1159 = vmatprep.subr.mxu0 0.0
  %1160 = vmatpush1.msra.mxu0 0.0
  %1161 = vmatprep.subr.mxu0 0.0
  %1162 = vmatpush1.msra.mxu0 0.0
  %1163 = vmatprep.subr.mxu0 0.0
  %1164 = vmatpush1.msra.mxu0 0.0
  %1165 = vmatprep.subr.mxu0 0.0
  %1166 = vmatpush1.msra.mxu0 0.0
  %1167 = vmatprep.subr.mxu0 0.0
  %1168 = vmatpush1.msra.mxu0 0.0
  %1169 = vmatprep.subr.mxu0 0.0
  %1170 = vmatpush1.msra.mxu0 0.0
  %1171 = vmatprep.subr.mxu0 0.0
  %1172 = vmatpush1.msra.mxu0 0.0
  %1173 = vmatprep.subr.mxu0 0.0
  %1174 = vmatpush1.msra.mxu0 0.0
  %1175 = vmatprep.mubr.f32.mxu0 0.0
  %1176 = vmatmul.mubr.f32.gmra.mrb[0].mxu0 %v1109
  %v1177 = vpop.f32.mrb[0].mxu0
  %v1178 = vadd.f32 %v1107, %v1177
  %v1179 = vpop.f32.mrb[0].mxu0
  %1180 = vdwg.mxu0
  %v1181 = vmax.f32 %v1178, 0.0
  %v1183 = vrot.slane %v1181, 6
  %v1185 = vrot.slane %v1181, 4
  %v1187 = vrot.slane %v1181, 2
  %vm1189 = vcmask 1041408
  %v1190 = vsel %vm1189, %v1181, %v1183
  %vm1191 = vcmask 1043456
  %v1192 = vsel %vm1191, %v1190, %v1185
  %vm1193 = vcmask 1045504
  %v1194 = vsel %vm1193, %v1192, %v1187
  %v1195 = vld [vmem:[%s2] sm:$0x3]
  %v1197 = vrot.slane %v1195, 6
  %v1199 = vrot.slane %v1195, 4
  %v1201 = vrot.slane %v1195, 2
  %v1203 = vsel %vm1189, %v1195, %v1197
  %v1204 = vsel %vm1191, %v1203, %v1199
  %v1205 = vsel %vm1193, %v1204, %v1201
  %v1206 = vld [vmem:[%s1] sm:$0xff]
  %v1207 = vld [vmem:[%s1 + $0x8] sm:$0xff]
  %1210 = vrot.lane.b32.xlu0 %v1206, 64
  %v1211 = vpop.permute.xlu0 %1210
  %1212 = vrot.lane.b32.xlu0 %v1207, 64
  %v1213 = vpop.permute.xlu0 %1212
  %v1216 = vsel %vm665, %v1194, %v1211
  %v1217 = vsel %vm665, %v1194, %v1213
  %v1218 = vld [vmem:[%s4 + $0x2f0] sm:$0xff]
  %v1219 = vld [vmem:[%s4 + $0x2f8] sm:$0xff]
  %v1220 = vld [vmem:[%s4 + $0x300] sm:$0xff]
  %v1221 = vld [vmem:[%s4 + $0x308] sm:$0xff]
  %v1222 = vld [vmem:[%s4 + $0x310] sm:$0xff]
  %v1223 = vld [vmem:[%s4 + $0x318] sm:$0xff]
  %v1224 = vld [vmem:[%s4 + $0x320] sm:$0xff]
  %v1225 = vld [vmem:[%s4 + $0x328] sm:$0xff]
  %v1226 = vld [vmem:[%s4 + $0x330] sm:$0xff]
  %v1227 = vld [vmem:[%s4 + $0x338] sm:$0xff]
  %v1228 = vld [vmem:[%s4 + $0x340] sm:$0xff]
  %v1229 = vld [vmem:[%s4 + $0x348] sm:$0xff]
  %v1230 = vld [vmem:[%s4 + $0x350] sm:$0xff]
  %v1231 = vld [vmem:[%s4 + $0x358] sm:$0xff]
  %v1232 = vld [vmem:[%s4 + $0x360] sm:$0xff]
  %v1233 = vld [vmem:[%s4 + $0x368] sm:$0xff]
  %1235 = vset.pattern.permute.xlu0 0
  %1236 = vperm.xlu0 %1235, %v1205
  %v1237 = vpop.permute.xlu0 %1236
  %v1239 = vlaneseq
  %v1240 = vshrl.u32 %v1239, 7
  %v1241 = vsub.s32 5, %v1240
  %v1242 = vrot.slane %v23, %v1241
  %v1243 = vmul.f32 %v1237, %v1242
  %1244 = vmatprep.subr.mxu0 0.0
  %1245 = vmatpush1.msra.mxu0 %v1218
  %1246 = vmatprep.subr.mxu0 0.0
  %1247 = vmatpush1.msra.mxu0 %v1219
  %1248 = vmatprep.subr.mxu0 0.0
  %1249 = vmatpush1.msra.mxu0 %v1220
  %1250 = vmatprep.subr.mxu0 0.0
  %1251 = vmatpush1.msra.mxu0 %v1221
  %1252 = vmatprep.subr.mxu0 0.0
  %1253 = vmatpush1.msra.mxu0 %v1222
  %1254 = vmatprep.subr.mxu0 0.0
  %1255 = vmatpush1.msra.mxu0 %v1223
  %1256 = vmatprep.subr.mxu0 0.0
  %1257 = vmatpush1.msra.mxu0 %v1224
  %1258 = vmatprep.subr.mxu0 0.0
  %1259 = vmatpush1.msra.mxu0 %v1225
  %1260 = vmatprep.subr.mxu0 0.0
  %1261 = vmatpush1.msra.mxu0 %v1226
  %1262 = vmatprep.subr.mxu0 0.0
  %1263 = vmatpush1.msra.mxu0 %v1227
  %1264 = vmatprep.subr.mxu0 0.0
  %1265 = vmatpush1.msra.mxu0 %v1228
  %1266 = vmatprep.subr.mxu0 0.0
  %1267 = vmatpush1.msra.mxu0 %v1229
  %1268 = vmatprep.subr.mxu0 0.0
  %1269 = vmatpush1.msra.mxu0 %v1230
  %1270 = vmatprep.subr.mxu0 0.0
  %1271 = vmatpush1.msra.mxu0 %v1231
  %1272 = vmatprep.subr.mxu0 0.0
  %1273 = vmatpush1.msra.mxu0 %v1232
  %1274 = vmatprep.subr.mxu0 0.0
  %1275 = vmatpush1.msra.mxu0 %v1233
  %1276 = vmatprep.subr.mxu0 0.0
  %1277 = vmatpush1.msra.mxu0 0.0
  %1278 = vmatprep.subr.mxu0 0.0
  %1279 = vmatpush1.msra.mxu0 0.0
  %1280 = vmatprep.subr.mxu0 0.0
  %1281 = vmatpush1.msra.mxu0 0.0
  %1282 = vmatprep.subr.mxu0 0.0
  %1283 = vmatpush1.msra.mxu0 0.0
  %1284 = vmatprep.subr.mxu0 0.0
  %1285 = vmatpush1.msra.mxu0 0.0
  %1286 = vmatprep.subr.mxu0 0.0
  %1287 = vmatpush1.msra.mxu0 0.0
  %1288 = vmatprep.subr.mxu0 0.0
  %1289 = vmatpush1.msra.mxu0 0.0
  %1290 = vmatprep.subr.mxu0 0.0
  %1291 = vmatpush1.msra.mxu0 0.0
  %1292 = vmatprep.subr.mxu0 0.0
  %1293 = vmatpush1.msra.mxu0 0.0
  %1294 = vmatprep.subr.mxu0 0.0
  %1295 = vmatpush1.msra.mxu0 0.0
  %1296 = vmatprep.subr.mxu0 0.0
  %1297 = vmatpush1.msra.mxu0 0.0
  %1298 = vmatprep.subr.mxu0 0.0
  %1299 = vmatpush1.msra.mxu0 0.0
  %1300 = vmatprep.subr.mxu0 0.0
  %1301 = vmatpush1.msra.mxu0 0.0
  %1302 = vmatprep.subr.mxu0 0.0
  %1303 = vmatpush1.msra.mxu0 0.0
  %1304 = vmatprep.subr.mxu0 0.0
  %1305 = vmatpush1.msra.mxu0 0.0
  %1306 = vmatprep.subr.mxu0 0.0
  %1307 = vmatpush1.msra.mxu0 0.0
  %1308 = vmatprep.mubr.f32.mxu0 0.0
  %1309 = vmatmul.mubr.f32.gmra.mrb[0].mxu0 %v1216
  %v1310 = vpop.f32.mrb[0].mxu0
  %v1311 = vadd.f32 %v1243, %v1310
  %v1312 = vpop.f32.mrb[0].mxu0
  %1313 = vmatprep.mubr.f32.mxu0 0.0
  %1314 = vmatmul.mubr.f32.gmra.mrb[0].mxu0 %v1217
  %v1315 = vpop.f32.mrb[0].mxu0
  %v1316 = vadd.f32 %v1243, %v1315
  %v1317 = vpop.f32.mrb[0].mxu0
  %1318 = vdwg.mxu0
  %v1319 = vlaneseq
  %v1320 = vshrl.u32 %v1319, 7
  %v1321 = vsub.s32 4, %v1320
  %v1322 = vrot.slane %v23, %v1321
  %v1323 = vadd.f32 %v1311, %v1322
  %v1324 = vadd.f32 %v1316, %v1322
  %v1325 = vmax.f32 %v1323, 0.0
  %v1326 = vmax.f32 %v1324, 0.0
  %v1327 = vld [vmem:[%s4 + $0x370] sm:$0xff]
  %v1328 = vld [vmem:[%s4 + $0x378] sm:$0xff]
  %v1329 = vld [vmem:[%s4 + $0x380] sm:$0xff]
  %v1330 = vld [vmem:[%s4 + $0x388] sm:$0xff]
  %v1331 = vld [vmem:[%s4 + $0x390] sm:$0xff]
  %v1332 = vld [vmem:[%s4 + $0x398] sm:$0xff]
  %v1333 = vld [vmem:[%s4 + $0x3a0] sm:$0xff]
  %v1334 = vld [vmem:[%s4 + $0x3a8] sm:$0xff]
  %v1335 = vld [vmem:[%s4 + $0x3b0] sm:$0xff]
  %v1336 = vld [vmem:[%s4 + $0x3b8] sm:$0xff]
  %v1337 = vld [vmem:[%s4 + $0x3c0] sm:$0xff]
  %v1338 = vld [vmem:[%s4 + $0x3c8] sm:$0xff]
  %v1339 = vld [vmem:[%s4 + $0x3d0] sm:$0xff]
  %v1340 = vld [vmem:[%s4 + $0x3d8] sm:$0xff]
  %v1341 = vld [vmem:[%s4 + $0x3e0] sm:$0xff]
  %v1342 = vld [vmem:[%s4 + $0x3e8] sm:$0xff]
  %v1343 = vlaneseq
  %v1344 = vshrl.u32 %v1343, 7
  %v1345 = vsub.s32 6, %v1344
  %v1346 = vrot.slane %v23, %v1345
  %1347 = vmatprep.subr.mxu0 0.0
  %1348 = vmatpush1.msra.mxu0 %v1327
  %1349 = vmatprep.subr.mxu0 0.0
  %1350 = vmatpush1.msra.mxu0 %v1328
  %1351 = vmatprep.subr.mxu0 0.0
  %1352 = vmatpush1.msra.mxu0 %v1329
  %1353 = vmatprep.subr.mxu0 0.0
  %1354 = vmatpush1.msra.mxu0 %v1330
  %1355 = vmatprep.subr.mxu0 0.0
  %1356 = vmatpush1.msra.mxu0 %v1331
  %1357 = vmatprep.subr.mxu0 0.0
  %1358 = vmatpush1.msra.mxu0 %v1332
  %1359 = vmatprep.subr.mxu0 0.0
  %1360 = vmatpush1.msra.mxu0 %v1333
  %1361 = vmatprep.subr.mxu0 0.0
  %1362 = vmatpush1.msra.mxu0 %v1334
  %1363 = vmatprep.subr.mxu0 0.0
  %1364 = vmatpush1.msra.mxu0 %v1335
  %1365 = vmatprep.subr.mxu0 0.0
  %1366 = vmatpush1.msra.mxu0 %v1336
  %1367 = vmatprep.subr.mxu0 0.0
  %1368 = vmatpush1.msra.mxu0 %v1337
  %1369 = vmatprep.subr.mxu0 0.0
  %1370 = vmatpush1.msra.mxu0 %v1338
  %1371 = vmatprep.subr.mxu0 0.0
  %1372 = vmatpush1.msra.mxu0 %v1339
  %1373 = vmatprep.subr.mxu0 0.0
  %1374 = vmatpush1.msra.mxu0 %v1340
  %1375 = vmatprep.subr.mxu0 0.0
  %1376 = vmatpush1.msra.mxu0 %v1341
  %1377 = vmatprep.subr.mxu0 0.0
  %1378 = vmatpush1.msra.mxu0 %v1342
  %1379 = vmatprep.subr.mxu0 0.0
  %1380 = vmatpush1.msra.mxu0 0.0
  %1381 = vmatprep.subr.mxu0 0.0
  %1382 = vmatpush1.msra.mxu0 0.0
  %1383 = vmatprep.subr.mxu0 0.0
  %1384 = vmatpush1.msra.mxu0 0.0
  %1385 = vmatprep.subr.mxu0 0.0
  %1386 = vmatpush1.msra.mxu0 0.0
  %1387 = vmatprep.subr.mxu0 0.0
  %1388 = vmatpush1.msra.mxu0 0.0
  %1389 = vmatprep.subr.mxu0 0.0
  %1390 = vmatpush1.msra.mxu0 0.0
  %1391 = vmatprep.subr.mxu0 0.0
  %1392 = vmatpush1.msra.mxu0 0.0
  %1393 = vmatprep.subr.mxu0 0.0
  %1394 = vmatpush1.msra.mxu0 0.0
  %1395 = vmatprep.subr.mxu0 0.0
  %1396 = vmatpush1.msra.mxu0 0.0
  %1397 = vmatprep.subr.mxu0 0.0
  %1398 = vmatpush1.msra.mxu0 0.0
  %1399 = vmatprep.subr.mxu0 0.0
  %1400 = vmatpush1.msra.mxu0 0.0
  %1401 = vmatprep.subr.mxu0 0.0
  %1402 = vmatpush1.msra.mxu0 0.0
  %1403 = vmatprep.subr.mxu0 0.0
  %1404 = vmatpush1.msra.mxu0 0.0
  %1405 = vmatprep.subr.mxu0 0.0
  %1406 = vmatpush1.msra.mxu0 0.0
  %1407 = vmatprep.subr.mxu0 0.0
  %1408 = vmatpush1.msra.mxu0 0.0
  %1409 = vmatprep.subr.mxu0 0.0
  %1410 = vmatpush1.msra.mxu0 0.0
  %1411 = vmatprep.mubr.f32.mxu0 0.0
  %1412 = vmatmul.mubr.f32.gmra.mrb[0].mxu0 %v1325
  %v1413 = vpop.f32.mrb[0].mxu0
  %v1414 = vadd.f32 %v1346, %v1413
  %v1415 = vpop.f32.mrb[0].mxu0
  %1416 = vmatprep.mubr.f32.mxu0 0.0
  %1417 = vmatmul.mubr.f32.gmra.mrb[0].mxu0 %v1326
  %v1418 = vpop.f32.mrb[0].mxu0
  %v1419 = vadd.f32 %v1346, %v1418
  %v1420 = vpop.f32.mrb[0].mxu0
  %1421 = vdwg.mxu0
  %v1422 = vmax.f32 %v1414, 0.0
  %v1423 = vmax.f32 %v1419, 0.0
  %v1424 = vld [vmem:[%s4 + $0x3f0] sm:$0xff]
  %v1425 = vld [vmem:[%s4 + $0x3f8] sm:$0xff]
  %v1426 = vld [vmem:[%s4 + $0x400] sm:$0xff]
  %v1427 = vld [vmem:[%s4 + $0x408] sm:$0xff]
  %v1428 = vld [vmem:[%s4 + $0x410] sm:$0xff]
  %v1429 = vld [vmem:[%s4 + $0x418] sm:$0xff]
  %v1430 = vld [vmem:[%s4 + $0x420] sm:$0xff]
  %v1431 = vld [vmem:[%s4 + $0x428] sm:$0xff]
  %v1432 = vld [vmem:[%s4 + $0x430] sm:$0xff]
  %v1433 = vld [vmem:[%s4 + $0x438] sm:$0xff]
  %v1434 = vld [vmem:[%s4 + $0x440] sm:$0xff]
  %v1435 = vld [vmem:[%s4 + $0x448] sm:$0xff]
  %v1436 = vld [vmem:[%s4 + $0x450] sm:$0xff]
  %v1437 = vld [vmem:[%s4 + $0x458] sm:$0xff]
  %v1438 = vld [vmem:[%s4 + $0x460] sm:$0xff]
  %v1439 = vld [vmem:[%s4 + $0x468] sm:$0xff]
  %v1440 = vlaneseq
  %v1441 = vshrl.u32 %v1440, 7
  %v1442 = vsub.s32 7, %v1441
  %v1443 = vrot.slane %v23, %v1442
  %1444 = vmatprep.subr.mxu0 0.0
  %1445 = vmatpush1.msra.mxu0 %v1424
  %1446 = vmatprep.subr.mxu0 0.0
  %1447 = vmatpush1.msra.mxu0 %v1425
  %1448 = vmatprep.subr.mxu0 0.0
  %1449 = vmatpush1.msra.mxu0 %v1426
  %1450 = vmatprep.subr.mxu0 0.0
  %1451 = vmatpush1.msra.mxu0 %v1427
  %1452 = vmatprep.subr.mxu0 0.0
  %1453 = vmatpush1.msra.mxu0 %v1428
  %1454 = vmatprep.subr.mxu0 0.0
  %1455 = vmatpush1.msra.mxu0 %v1429
  %1456 = vmatprep.subr.mxu0 0.0
  %1457 = vmatpush1.msra.mxu0 %v1430
  %1458 = vmatprep.subr.mxu0 0.0
  %1459 = vmatpush1.msra.mxu0 %v1431
  %1460 = vmatprep.subr.mxu0 0.0
  %1461 = vmatpush1.msra.mxu0 %v1432
  %1462 = vmatprep.subr.mxu0 0.0
  %1463 = vmatpush1.msra.mxu0 %v1433
  %1464 = vmatprep.subr.mxu0 0.0
  %1465 = vmatpush1.msra.mxu0 %v1434
  %1466 = vmatprep.subr.mxu0 0.0
  %1467 = vmatpush1.msra.mxu0 %v1435
  %1468 = vmatprep.subr.mxu0 0.0
  %1469 = vmatpush1.msra.mxu0 %v1436
  %1470 = vmatprep.subr.mxu0 0.0
  %1471 = vmatpush1.msra.mxu0 %v1437
  %1472 = vmatprep.subr.mxu0 0.0
  %1473 = vmatpush1.msra.mxu0 %v1438
  %1474 = vmatprep.subr.mxu0 0.0
  %1475 = vmatpush1.msra.mxu0 %v1439
  %1476 = vmatprep.subr.mxu0 0.0
  %1477 = vmatpush1.msra.mxu0 0.0
  %1478 = vmatprep.subr.mxu0 0.0
  %1479 = vmatpush1.msra.mxu0 0.0
  %1480 = vmatprep.subr.mxu0 0.0
  %1481 = vmatpush1.msra.mxu0 0.0
  %1482 = vmatprep.subr.mxu0 0.0
  %1483 = vmatpush1.msra.mxu0 0.0
  %1484 = vmatprep.subr.mxu0 0.0
  %1485 = vmatpush1.msra.mxu0 0.0
  %1486 = vmatprep.subr.mxu0 0.0
  %1487 = vmatpush1.msra.mxu0 0.0
  %1488 = vmatprep.subr.mxu0 0.0
  %1489 = vmatpush1.msra.mxu0 0.0
  %1490 = vmatprep.subr.mxu0 0.0
  %1491 = vmatpush1.msra.mxu0 0.0
  %1492 = vmatprep.subr.mxu0 0.0
  %1493 = vmatpush1.msra.mxu0 0.0
  %1494 = vmatprep.subr.mxu0 0.0
  %1495 = vmatpush1.msra.mxu0 0.0
  %1496 = vmatprep.subr.mxu0 0.0
  %1497 = vmatpush1.msra.mxu0 0.0
  %1498 = vmatprep.subr.mxu0 0.0
  %1499 = vmatpush1.msra.mxu0 0.0
  %1500 = vmatprep.subr.mxu0 0.0
  %1501 = vmatpush1.msra.mxu0 0.0
  %1502 = vmatprep.subr.mxu0 0.0
  %1503 = vmatpush1.msra.mxu0 0.0
  %1504 = vmatprep.subr.mxu0 0.0
  %1505 = vmatpush1.msra.mxu0 0.0
  %1506 = vmatprep.subr.mxu0 0.0
  %1507 = vmatpush1.msra.mxu0 0.0
  %1508 = vmatprep.mubr.f32.mxu0 0.0
  %1509 = vmatmul.mubr.f32.gmra.mrb[0].mxu0 %v1422
  %v1510 = vpop.f32.mrb[0].mxu0
  %v1511 = vadd.f32 %v1443, %v1510
  %v1512 = vpop.f32.mrb[0].mxu0
  %1513 = vmatprep.mubr.f32.mxu0 0.0
  %1514 = vmatmul.mubr.f32.gmra.mrb[0].mxu0 %v1423
  %v1515 = vpop.f32.mrb[0].mxu0
  %v1516 = vadd.f32 %v1443, %v1515
  %v1517 = vpop.f32.mrb[0].mxu0
  %1518 = vdwg.mxu0
  %1519 = vst [vmem:[%s6] sm:$0xff] %v1511
  %1520 = vst [vmem:[%s6 + $0x8] sm:$0xff] %v1516
  // Predicated region
  $region26: #{proposer_forward.1} parent=0 // pred_check
    _
  $region27: #{proposer_forward.1} parent=0 // pred_check_branch
    %1522 = sbr.rel (0) target = $region29
  $region28: #{proposer_forward.1} parent=0 // pred_region
    _
  $region29: #{proposer_forward.1} parent=0 // pred_fallthru
    _
  // Predicated region
  $region30: #{proposer_forward.1} parent=0 // pred_check
    _
  $region31: #{proposer_forward.1} parent=0 // pred_check_branch
    %1524 = sbr.rel (0) target = $region33
  $region32: #{proposer_forward.1} parent=0 // pred_region
    _
  $region33: #{proposer_forward.1} parent=0 // pred_fallthru
    _

</llo_original>
